<compile_context>
chip_gen: v7x
topology: tpu7x:2x2x1
jax: 0.10.0
libtpu: 0.0.40
codegen_flags: <defaults>
</compile_context>

<pallas_src>
import math

import jax
import jax.numpy as jnp
from jax.experimental import pallas as pl
from jax.experimental.pallas import tpu as pltpu


def _make_kernel(Ns, matmul_dtype):
    """Build the Pallas kernel body. Ns and the matmul dtype are static."""

    def kernel(x_ref, xw_ref,
               wt_ref, bt_ref, wg_ref, bg_ref, wp_ref, bp_ref,
               ww_ref, bw_ref,
               o_ref,
               g_scr, phi_scr):
        nt = pl.program_id(1)

        # ---- once per batch: pooled g / phi branches into VMEM scratch ----
        @pl.when(nt == 0)
        def _():
            xw = xw_ref[0]                                      # (4*Ns, C) f32
            # One big matmul per branch over all 4 pool-window slots at once.
            g4 = jnp.dot(xw.astype(matmul_dtype), wg_ref[...],
                         preferred_element_type=jnp.float32)    # (4*Ns, IC)
            p4 = jnp.dot(xw, wp_ref[...],
                         preferred_element_type=jnp.float32)    # (4*Ns, IC) f32

            def pool4(z):  # 2x2 max-pool == max over the 4 slot-major chunks
                return jnp.maximum(
                    jnp.maximum(z[0 * Ns:1 * Ns], z[1 * Ns:2 * Ns]),
                    jnp.maximum(z[2 * Ns:3 * Ns], z[3 * Ns:4 * Ns]))

            # Per-channel conv bias added AFTER the pool: equivalent to
            # PyTorch's conv(+bias) -> MaxPool2d(2), since the bias is constant
            # per channel (max(a+c, b+c) = max(a, b)+c).
            g_scr[...] = (pool4(g4) + bg_ref[...]).astype(g_scr.dtype)
            phi_scr[...] = pool4(p4) + bp_ref[...]

        # ---- per N-tile: theta, attention, W conv + folded BN + residual ----
        x = x_ref[0]                                            # (TN, C) f32
        theta = (jnp.dot(x, wt_ref[...],
                         preferred_element_type=jnp.float32)
                 + bt_ref[...])                                 # (TN, IC)

        # Logits kept in f32: exp() would amplify bf16 rounding of the raw
        # (unscaled) non-local logits.
        f = jax.lax.dot_general(theta, phi_scr[...], (((1,), (1,)), ((), ())),
                                preferred_element_type=jnp.float32)  # (TN, Ns)
        f = f - jnp.max(f, axis=-1, keepdims=True)
        e = jnp.exp(f)
        denom = jnp.sum(e, axis=-1, keepdims=True)              # (TN, 1)

        # Unnormalized attention @ g, softmax denominator fused afterwards via
        # an approximate reciprocal (EUP slot, ~free).
        y = jnp.dot(e.astype(matmul_dtype), g_scr[...],
                    preferred_element_type=jnp.float32)         # (TN, IC)
        y = y * pl.reciprocal(denom, approx=True)

        # W 1x1 conv with BN scale folded into the weight and conv-bias / BN
        # shift folded into the bias; residual add.
        o_ref[0] = (jnp.dot(y.astype(matmul_dtype), ww_ref[...],
                            preferred_element_type=jnp.float32)
                    + bw_ref[...] + x)

    return kernel


def nonlocal_block_2d(x_nchw, params, *, matmul_dtype=jnp.bfloat16,
                      tile_n=128):
    B, C, H, W = x_nchw.shape
    IC = params["wg"].shape[1]
    # TODO(synk): odd H or W would need masked pooling to match MaxPool2d(2).
    assert H % 2 == 0 and W % 2 == 0, "2x2 max-pool path assumes even H and W"
    N = H * W
    Ns = (H // 2) * (W // 2)
    TN = min(tile_n, N)
    assert N % TN == 0 and TN % 8 == 0, "tile_n must divide N and be 8-aligned"

    x_nhwc = jnp.transpose(x_nchw, (0, 2, 3, 1)).astype(jnp.float32)  # (B,H,W,C)
    x_flat = x_nhwc.reshape(B, N, C)                                  # (B,N,C)
    # 2x2 pool-window view: slot k = kh*2+kw (major), pooled pos m = h2*(W/2)+w2
    x_win = (x_nhwc.reshape(B, H // 2, 2, W // 2, 2, C)
             .transpose(0, 2, 4, 1, 3, 5)
             .reshape(B, 4 * Ns, C))                                  # (B,4Ns,C)

    # Fold W-conv bias + inference BatchNorm into a single weight/bias pair.
    eps = 1e-5
    inv_std = 1.0 / jnp.sqrt(params["run_var"] + eps)
    scale = params["gamma"] * inv_std                                 # (C,)
    shift = params["beta"] - params["run_mean"] * scale               # (C,)
    ww_f = (params["ww"] * scale[None, :]).astype(matmul_dtype)       # (IC, C)
    bw_f = params["bw"] * scale[None, :] + shift[None, :]             # (1, C)

    wt, bt = params["wt"], params["bt"]
    wg, bg = params["wg"].astype(matmul_dtype), params["bg"]
    wp, bp = params["wp"], params["bp"]

    def resident(shape):
        # Weight arrays: full-array block, same tile every grid step.
        return pl.BlockSpec(shape, lambda b, n: (0, 0))

    grid_spec = pltpu.PrefetchScalarGridSpec(
        num_scalar_prefetch=0,
        grid=(B, N // TN),
        in_specs=[
            pl.BlockSpec((1, TN, C), lambda b, n: (b, n, 0)),        # x tile
            pl.BlockSpec((1, 4 * Ns, C), lambda b, n: (b, 0, 0)),    # per-batch pool view
            resident((C, IC)), resident((1, IC)),                    # theta
            resident((C, IC)), resident((1, IC)),                    # g
            resident((C, IC)), resident((1, IC)),                    # phi
            resident((IC, C)), resident((1, C)),                     # folded W conv
        ],
        out_specs=pl.BlockSpec((1, TN, C), lambda b, n: (b, n, 0)),
        scratch_shapes=[
            pltpu.VMEM((Ns, IC), matmul_dtype),   # pooled g  (per batch)
            pltpu.VMEM((Ns, IC), jnp.float32),    # pooled phi (per batch)
        ],
    )

    out = pl.pallas_call(
        _make_kernel(Ns, matmul_dtype),
        out_shape=jax.ShapeDtypeStruct((B, N, C), jnp.float32),
        grid_spec=grid_spec,
        compiler_params=pltpu.CompilerParams(
            # Batch iterations are independent -> "parallel" (v7x 2 TCs);
            # the N-tile axis carries per-batch g/phi scratch -> "arbitrary".
            dimension_semantics=("parallel", "arbitrary"),
            # v5e scoped default is 16 MiB; stay below v7x's 64 MiB physical
            # VMEM with headroom for double-buffered x/out tiles.
            vmem_limit_bytes=48 * 1024 * 1024,
        ),
    )(x_flat, x_win, wt, bt, wg, bg, wp, bp, ww_f, bw_f)

    return out.reshape(B, H, W, C).transpose(0, 3, 1, 2)              # NCHW


def nonlocal_block_ref(x, params):
    """Pure-JAX reference mirroring the PyTorch forward (eval-mode BN)."""
    B, C, H, W = x.shape
    IC = params["wg"].shape[1]

    def conv1x1(inp, w, b):  # w: (Cin, Cout)
        return jnp.einsum('bchw,cd->bdhw', inp, w) + b.reshape(1, -1, 1, 1)

    def maxpool2(inp):
        b_, d_, h_, w_ = inp.shape
        return inp.reshape(b_, d_, h_ // 2, 2, w_ // 2, 2).max(axis=(3, 5))

    g = maxpool2(conv1x1(x, params["wg"], params["bg"]))
    phi = maxpool2(conv1x1(x, params["wp"], params["bp"]))
    theta = conv1x1(x, params["wt"], params["bt"])

    g_x = g.reshape(B, IC, -1).transpose(0, 2, 1)
    theta_x = theta.reshape(B, IC, -1).transpose(0, 2, 1)
    phi_x = phi.reshape(B, IC, -1)
    f = jax.nn.softmax(theta_x @ phi_x, axis=-1)
    y = (f @ g_x).transpose(0, 2, 1).reshape(B, IC, H, W)

    wy = conv1x1(y, params["ww"], params["bw"])
    eps = 1e-5
    inv_std = 1.0 / jnp.sqrt(params["run_var"] + eps)
    scale = (params["gamma"] * inv_std).reshape(1, C, 1, 1)
    shift = (params["beta"] - params["run_mean"] * params["gamma"] * inv_std
             ).reshape(1, C, 1, 1)
    return wy * scale + shift + x


if __name__ == "__main__":
    key = jax.random.PRNGKey(0)
    B, C, H, W = 2, 4, 16, 16
    IC = max(C // 2, 1)  # inter_channels = in_channels // 2

    ks = jax.random.split(key, 11)
    std_branch = math.sqrt(2.0 / IC)   # g / theta / phi: n = 1*1*inter_channels
    std_w = math.sqrt(2.0 / C)         # W conv:          n = 1*1*in_channels

    params = dict(
        wg=jax.random.normal(ks[0], (C, IC), jnp.float32) * std_branch,
        bg=jax.random.normal(ks[1], (1, IC), jnp.float32) * 0.1,
        wt=jax.random.normal(ks[2], (C, IC), jnp.float32) * std_branch,
        bt=jax.random.normal(ks[3], (1, IC), jnp.float32) * 0.1,
        wp=jax.random.normal(ks[4], (C, IC), jnp.float32) * std_branch,
        bp=jax.random.normal(ks[5], (1, IC), jnp.float32) * 0.1,
        ww=jax.random.normal(ks[6], (IC, C), jnp.float32) * std_w,
        bw=jax.random.normal(ks[7], (1, C), jnp.float32) * 0.1,
        gamma=1.0 + 0.5 * jax.random.normal(ks[8], (C,), jnp.float32),
        beta=0.1 * jax.random.normal(ks[9], (C,), jnp.float32),
        run_mean=jnp.zeros((C,), jnp.float32),
        run_var=jnp.ones((C,), jnp.float32),
    )

    x = jax.random.normal(ks[10], (B, C, H, W), jnp.float32)

    z_ref = nonlocal_block_ref(x, params)

    # Default run: mixed precision (bf16 matmul operands, f32 accumulation).
    z = jax.block_until_ready(nonlocal_block_2d(x, params))
    assert z.shape == x.shape
    rel_err = float(jnp.max(jnp.abs(z - z_ref)) /
                    (jnp.max(jnp.abs(z_ref)) + 1e-6))
    assert rel_err < 0.08, f"bf16 path error too large: {rel_err}"

    # Full-f32 run through the same kernel: tight check vs. the reference.
    z32 = jax.block_until_ready(
        nonlocal_block_2d(x, params, matmul_dtype=jnp.float32))
    assert jnp.allclose(z32, z_ref, atol=3e-2, rtol=3e-2), (
        f"max abs diff = {jnp.max(jnp.abs(z32 - z_ref))}")

    print("KERNEL_OK")
</pallas_src>

<mosaic_0001>
module attributes {stable_mosaic.version = 11 : i64} {
  func.func @kernel(%arg0: i32, %arg1: i32, %arg2: memref<1x128x4xf32, #tpu.memory_space<vmem>>, %arg3: memref<1x256x4xf32, #tpu.memory_space<vmem>>, %arg4: memref<4x2xf32, #tpu.memory_space<vmem>>, %arg5: memref<1x2xf32, #tpu.memory_space<vmem>>, %arg6: memref<4x2xbf16, #tpu.memory_space<vmem>>, %arg7: memref<1x2xf32, #tpu.memory_space<vmem>>, %arg8: memref<4x2xf32, #tpu.memory_space<vmem>>, %arg9: memref<1x2xf32, #tpu.memory_space<vmem>>, %arg10: memref<2x4xbf16, #tpu.memory_space<vmem>>, %arg11: memref<1x4xf32, #tpu.memory_space<vmem>>, %arg12: memref<1x128x4xf32, #tpu.memory_space<vmem>>, %arg13: memref<64x2xbf16, #tpu.memory_space<vmem>>, %arg14: memref<64x2xf32, #tpu.memory_space<vmem>>) attributes {dimension_semantics = [#tpu.dimension_semantics<parallel>, #tpu.dimension_semantics<arbitrary>], iteration_bounds = array<i64: 2, 2>, scalar_prefetch = 0 : i64, scratch_operands = 2 : i64, tpu.core_type = #tpu.core_type<tc>, window_params = [{transform_indices = @transform_0, window_bounds = array<i64: 1, 128, 4>}, {transform_indices = @transform_1, window_bounds = array<i64: 1, 256, 4>}, {pipeline_mode = #tpu.pipeline_mode<synchronous>, transform_indices = @transform_2, window_bounds = array<i64: 4, 2>}, {pipeline_mode = #tpu.pipeline_mode<synchronous>, transform_indices = @transform_3, window_bounds = array<i64: 1, 2>}, {pipeline_mode = #tpu.pipeline_mode<synchronous>, transform_indices = @transform_4, window_bounds = array<i64: 4, 2>}, {pipeline_mode = #tpu.pipeline_mode<synchronous>, transform_indices = @transform_5, window_bounds = array<i64: 1, 2>}, {pipeline_mode = #tpu.pipeline_mode<synchronous>, transform_indices = @transform_6, window_bounds = array<i64: 4, 2>}, {pipeline_mode = #tpu.pipeline_mode<synchronous>, transform_indices = @transform_7, window_bounds = array<i64: 1, 2>}, {pipeline_mode = #tpu.pipeline_mode<synchronous>, transform_indices = @transform_8, window_bounds = array<i64: 2, 4>}, {pipeline_mode = #tpu.pipeline_mode<synchronous>, transform_indices = @transform_9, window_bounds = array<i64: 1, 4>}, {transform_indices = @transform_10, window_bounds = array<i64: 1, 128, 4>}]} {
    %c0_i32 = arith.constant 0 : i32
    %0 = arith.cmpi eq, %arg1, %c0_i32 : i32
    %1 = arith.extui %0 : i1 to i32
    %c0_i32_0 = arith.constant 0 : i32
    %2 = arith.cmpi ne, %1, %c0_i32_0 : i32
    scf.if %2 {
      %c0_23 = arith.constant 0 : index
      %c0_24 = arith.constant 0 : index
      %c0_25 = arith.constant 0 : index
      %35 = vector.load %arg3[%c0_23, %c0_24, %c0_25] : memref<1x256x4xf32, #tpu.memory_space<vmem>>, vector<1x256x4xf32>
      %36 = vector.shape_cast %35 : vector<1x256x4xf32> to vector<256x4xf32>
      %37 = arith.truncf %36 : vector<256x4xf32> to vector<256x4xbf16>
      %c0_26 = arith.constant 0 : index
      %c0_27 = arith.constant 0 : index
      %38 = vector.load %arg6[%c0_26, %c0_27] : memref<4x2xbf16, #tpu.memory_space<vmem>>, vector<4x2xbf16>
      %cst_28 = arith.constant dense<0.000000e+00> : vector<256x2xf32>
      %39 = tpu.matmul %37, %38, %cst_28 {dimension_numbers = #tpu.dot_dimension_numbers<[1], [0], [0], [1], [0, 0, 1, 1], [], []>} : vector<256x4xbf16>, vector<4x2xbf16>, vector<256x2xf32> -> vector<256x2xf32>
      %c0_29 = arith.constant 0 : index
      %c0_30 = arith.constant 0 : index
      %40 = vector.load %arg8[%c0_29, %c0_30] : memref<4x2xf32, #tpu.memory_space<vmem>>, vector<4x2xf32>
      %cst_31 = arith.constant dense<0.000000e+00> : vector<256x2xf32>
      %41 = tpu.matmul %36, %40, %cst_31 {dimension_numbers = #tpu.dot_dimension_numbers<[1], [0], [0], [1], [0, 0, 1, 1], [], []>} : vector<256x4xf32>, vector<4x2xf32>, vector<256x2xf32> -> vector<256x2xf32>
      %42 = vector.extract_strided_slice %39 {offsets = [0, 0], sizes = [64, 2], strides = [1, 1]} : vector<256x2xf32> to vector<64x2xf32>
      %43 = vector.extract_strided_slice %39 {offsets = [64, 0], sizes = [64, 2], strides = [1, 1]} : vector<256x2xf32> to vector<64x2xf32>
      %44 = arith.maximumf %42, %43 : vector<64x2xf32>
      %45 = vector.extract_strided_slice %39 {offsets = [128, 0], sizes = [64, 2], strides = [1, 1]} : vector<256x2xf32> to vector<64x2xf32>
      %46 = vector.extract_strided_slice %39 {offsets = [192, 0], sizes = [64, 2], strides = [1, 1]} : vector<256x2xf32> to vector<64x2xf32>
      %47 = arith.maximumf %45, %46 : vector<64x2xf32>
      %48 = arith.maximumf %44, %47 : vector<64x2xf32>
      %c0_32 = arith.constant 0 : index
      %c0_33 = arith.constant 0 : index
      %49 = vector.load %arg7[%c0_32, %c0_33] : memref<1x2xf32, #tpu.memory_space<vmem>>, vector<1x2xf32>
      %50 = vector.broadcast %49 : vector<1x2xf32> to vector<64x2xf32>
      %51 = arith.addf %48, %50 : vector<64x2xf32>
      %52 = arith.truncf %51 : vector<64x2xf32> to vector<64x2xbf16>
      %c0_34 = arith.constant 0 : index
      %c0_35 = arith.constant 0 : index
      %53 = vector.load %arg13[%c0_34, %c0_35] : memref<64x2xbf16, #tpu.memory_space<vmem>>, vector<64x2xbf16>
      tpu.vector_store %arg13[%c0_34, %c0_35], %52 {strides = array<i32>} : memref<64x2xbf16, #tpu.memory_space<vmem>>, vector<64x2xbf16>,
      %54 = vector.extract_strided_slice %41 {offsets = [0, 0], sizes = [64, 2], strides = [1, 1]} : vector<256x2xf32> to vector<64x2xf32>
      %55 = vector.extract_strided_slice %41 {offsets = [64, 0], sizes = [64, 2], strides = [1, 1]} : vector<256x2xf32> to vector<64x2xf32>
      %56 = arith.maximumf %54, %55 : vector<64x2xf32>
      %57 = vector.extract_strided_slice %41 {offsets = [128, 0], sizes = [64, 2], strides = [1, 1]} : vector<256x2xf32> to vector<64x2xf32>
      %58 = vector.extract_strided_slice %41 {offsets = [192, 0], sizes = [64, 2], strides = [1, 1]} : vector<256x2xf32> to vector<64x2xf32>
      %59 = arith.maximumf %57, %58 : vector<64x2xf32>
      %60 = arith.maximumf %56, %59 : vector<64x2xf32>
      %c0_36 = arith.constant 0 : index
      %c0_37 = arith.constant 0 : index
      %61 = vector.load %arg9[%c0_36, %c0_37] : memref<1x2xf32, #tpu.memory_space<vmem>>, vector<1x2xf32>
      %62 = vector.broadcast %61 : vector<1x2xf32> to vector<64x2xf32>
      %63 = arith.addf %60, %62 : vector<64x2xf32>
      %c0_38 = arith.constant 0 : index
      %c0_39 = arith.constant 0 : index
      %64 = vector.load %arg14[%c0_38, %c0_39] : memref<64x2xf32, #tpu.memory_space<vmem>>, vector<64x2xf32>
      tpu.vector_store %arg14[%c0_38, %c0_39], %63 {strides = array<i32>} : memref<64x2xf32, #tpu.memory_space<vmem>>, vector<64x2xf32>,
    } else {
    }
    %c0 = arith.constant 0 : index
    %c0_1 = arith.constant 0 : index
    %c0_2 = arith.constant 0 : index
    %3 = vector.load %arg2[%c0, %c0_1, %c0_2] : memref<1x128x4xf32, #tpu.memory_space<vmem>>, vector<1x128x4xf32>
    %4 = vector.shape_cast %3 : vector<1x128x4xf32> to vector<128x4xf32>
    %c0_3 = arith.constant 0 : index
    %c0_4 = arith.constant 0 : index
    %5 = vector.load %arg4[%c0_3, %c0_4] : memref<4x2xf32, #tpu.memory_space<vmem>>, vector<4x2xf32>
    %cst = arith.constant dense<0.000000e+00> : vector<128x2xf32>
    %6 = tpu.matmul %4, %5, %cst {dimension_numbers = #tpu.dot_dimension_numbers<[1], [0], [0], [1], [0, 0, 1, 1], [], []>} : vector<128x4xf32>, vector<4x2xf32>, vector<128x2xf32> -> vector<128x2xf32>
    %c0_5 = arith.constant 0 : index
    %c0_6 = arith.constant 0 : index
    %7 = vector.load %arg5[%c0_5, %c0_6] : memref<1x2xf32, #tpu.memory_space<vmem>>, vector<1x2xf32>
    %8 = vector.broadcast %7 : vector<1x2xf32> to vector<128x2xf32>
    %9 = arith.addf %6, %8 : vector<128x2xf32>
    %c0_7 = arith.constant 0 : index
    %c0_8 = arith.constant 0 : index
    %10 = vector.load %arg14[%c0_7, %c0_8] : memref<64x2xf32, #tpu.memory_space<vmem>>, vector<64x2xf32>
    %cst_9 = arith.constant dense<0.000000e+00> : vector<128x64xf32>
    %11 = tpu.matmul %9, %10, %cst_9 {dimension_numbers = #tpu.dot_dimension_numbers<[1], [1], [0], [0], [0, 0, 1, 0], [], []>} : vector<128x2xf32>, vector<64x2xf32>, vector<128x64xf32> -> vector<128x64xf32>
    %cst_10 = arith.constant dense<0xFF800000> : vector<128xf32>
    %12 = vector.multi_reduction <maximumf>, %11, %cst_10 [1] : vector<128x64xf32> to vector<128xf32>
    %13 = vector.shape_cast %12 : vector<128xf32> to vector<128x1xf32>
    %14 = vector.broadcast %13 : vector<128x1xf32> to vector<128x64xf32>
    %15 = arith.subf %11, %14 : vector<128x64xf32>
    %16 = math.exp %15 : vector<128x64xf32>
    %cst_11 = arith.constant dense<0.000000e+00> : vector<128xf32>
    %17 = vector.multi_reduction <add>, %16, %cst_11 [1] : vector<128x64xf32> to vector<128xf32>
    %18 = vector.shape_cast %17 : vector<128xf32> to vector<128x1xf32>
    %19 = arith.truncf %16 : vector<128x64xf32> to vector<128x64xbf16>
    %c0_12 = arith.constant 0 : index
    %c0_13 = arith.constant 0 : index
    %20 = vector.load %arg13[%c0_12, %c0_13] : memref<64x2xbf16, #tpu.memory_space<vmem>>, vector<64x2xbf16>
    %cst_14 = arith.constant dense<0.000000e+00> : vector<128x2xf32>
    %21 = tpu.matmul %19, %20, %cst_14 {dimension_numbers = #tpu.dot_dimension_numbers<[1], [0], [0], [1], [0, 0, 1, 1], [], []>} : vector<128x64xbf16>, vector<64x2xbf16>, vector<128x2xf32> -> vector<128x2xf32>
    %22 = tpu.reciprocal %18 {approx = true} : vector<128x1xf32> -> vector<128x1xf32>
    %23 = vector.broadcast %22 : vector<128x1xf32> to vector<128x2xf32>
    %24 = arith.mulf %21, %23 : vector<128x2xf32>
    %25 = arith.truncf %24 : vector<128x2xf32> to vector<128x2xbf16>
    %c0_15 = arith.constant 0 : index
    %c0_16 = arith.constant 0 : index
    %26 = vector.load %arg10[%c0_15, %c0_16] : memref<2x4xbf16, #tpu.memory_space<vmem>>, vector<2x4xbf16>
    %cst_17 = arith.constant dense<0.000000e+00> : vector<128x4xf32>
    %27 = tpu.matmul %25, %26, %cst_17 {dimension_numbers = #tpu.dot_dimension_numbers<[1], [0], [0], [1], [0, 0, 1, 1], [], []>} : vector<128x2xbf16>, vector<2x4xbf16>, vector<128x4xf32> -> vector<128x4xf32>
    %c0_18 = arith.constant 0 : index
    %c0_19 = arith.constant 0 : index
    %28 = vector.load %arg11[%c0_18, %c0_19] : memref<1x4xf32, #tpu.memory_space<vmem>>, vector<1x4xf32>
    %29 = vector.broadcast %28 : vector<1x4xf32> to vector<128x4xf32>
    %30 = arith.addf %27, %29 : vector<128x4xf32>
    %31 = arith.addf %30, %4 : vector<128x4xf32>
    %c0_20 = arith.constant 0 : index
    %c0_21 = arith.constant 0 : index
    %c0_22 = arith.constant 0 : index
    %32 = vector.load %arg12[%c0_20, %c0_21, %c0_22] : memref<1x128x4xf32, #tpu.memory_space<vmem>>, vector<1x128x4xf32>
    %33 = vector.shape_cast %32 : vector<1x128x4xf32> to vector<128x4xf32>
    %34 = vector.shape_cast %31 : vector<128x4xf32> to vector<1x128x4xf32>
    tpu.vector_store %arg12[%c0_20, %c0_21, %c0_22], %34 {strides = array<i32>} : memref<1x128x4xf32, #tpu.memory_space<vmem>>, vector<1x128x4xf32>,
    return
  }
  func.func @transform_0(%arg0: i32, %arg1: i32) -> (i32, i32, i32) {
    %c0_i32 = arith.constant 0 : i32
    %c0_i32_0 = arith.constant 0 : i32
    return %arg0, %arg1, %c0_i32 : i32, i32, i32
  }
  func.func @transform_1(%arg0: i32, %arg1: i32) -> (i32, i32, i32) {
    %c0_i32 = arith.constant 0 : i32
    %c0_i32_0 = arith.constant 0 : i32
    %c0_i32_1 = arith.constant 0 : i32
    return %arg0, %c0_i32, %c0_i32_0 : i32, i32, i32
  }
  func.func @transform_2(%arg0: i32, %arg1: i32) -> (i32, i32) {
    %c0_i32 = arith.constant 0 : i32
    %c0_i32_0 = arith.constant 0 : i32
    %c0_i32_1 = arith.constant 0 : i32
    return %c0_i32, %c0_i32_0 : i32, i32
  }
  func.func @transform_3(%arg0: i32, %arg1: i32) -> (i32, i32) {
    %c0_i32 = arith.constant 0 : i32
    %c0_i32_0 = arith.constant 0 : i32
    %c0_i32_1 = arith.constant 0 : i32
    return %c0_i32, %c0_i32_0 : i32, i32
  }
  func.func @transform_4(%arg0: i32, %arg1: i32) -> (i32, i32) {
    %c0_i32 = arith.constant 0 : i32
    %c0_i32_0 = arith.constant 0 : i32
    %c0_i32_1 = arith.constant 0 : i32
    return %c0_i32, %c0_i32_0 : i32, i32
  }
  func.func @transform_5(%arg0: i32, %arg1: i32) -> (i32, i32) {
    %c0_i32 = arith.constant 0 : i32
    %c0_i32_0 = arith.constant 0 : i32
    %c0_i32_1 = arith.constant 0 : i32
    return %c0_i32, %c0_i32_0 : i32, i32
  }
  func.func @transform_6(%arg0: i32, %arg1: i32) -> (i32, i32) {
    %c0_i32 = arith.constant 0 : i32
    %c0_i32_0 = arith.constant 0 : i32
    %c0_i32_1 = arith.constant 0 : i32
    return %c0_i32, %c0_i32_0 : i32, i32
  }
  func.func @transform_7(%arg0: i32, %arg1: i32) -> (i32, i32) {
    %c0_i32 = arith.constant 0 : i32
    %c0_i32_0 = arith.constant 0 : i32
    %c0_i32_1 = arith.constant 0 : i32
    return %c0_i32, %c0_i32_0 : i32, i32
  }
  func.func @transform_8(%arg0: i32, %arg1: i32) -> (i32, i32) {
    %c0_i32 = arith.constant 0 : i32
    %c0_i32_0 = arith.constant 0 : i32
    %c0_i32_1 = arith.constant 0 : i32
    return %c0_i32, %c0_i32_0 : i32, i32
  }
  func.func @transform_9(%arg0: i32, %arg1: i32) -> (i32, i32) {
    %c0_i32 = arith.constant 0 : i32
    %c0_i32_0 = arith.constant 0 : i32
    %c0_i32_1 = arith.constant 0 : i32
    return %c0_i32, %c0_i32_0 : i32, i32
  }
  func.func @transform_10(%arg0: i32, %arg1: i32) -> (i32, i32, i32) {
    %c0_i32 = arith.constant 0 : i32
    %c0_i32_0 = arith.constant 0 : i32
    return %arg0, %arg1, %c0_i32 : i32, i32, i32
  }
}

</mosaic_0001>

<llo_original>
// kernel: tpu_custom_call.1
$region0: #{tpu_custom_call.1}
  #allocation0 [shape = 'u32[]', space=smem, size = 0x4, offset = 0x4, fixed_abs, tag = 'smem constant byte address 0x4 - core index']
  #allocation1 [shape = 'u32[144,128]{1,0:T(1,128)}', space=vmem, size = 0x12000, scoped, tag = 'internal scratch']
  #allocation2 [shape = 'bf16[64,2]{1,0:T(16,128)(2,1)}', space=vmem, size = 0x4000, scoped, tag = 'scratch operand']
  #allocation3 [shape = 'f32[64,2]{1,0:T(8,128)}', space=vmem, size = 0x8000, scoped, tag = 'scratch operand']
  %s0 = inlined_call_operand.vmem [shape: f32[2,256,4], index: 0, kind: input, shape index: {}]
  %s1 = inlined_call_operand.vmem [shape: f32[2,256,4], index: 1, kind: input, shape index: {}]
  %s2 = inlined_call_operand.vmem [shape: f32[4,2], index: 2, kind: input, shape index: {}]
  %s3 = inlined_call_operand.vmem [shape: f32[1,2], index: 3, kind: input, shape index: {}]
  %s4 = inlined_call_operand.vmem [shape: bf16[4,2], index: 4, kind: input, shape index: {}]
  %s5 = inlined_call_operand.vmem [shape: f32[1,2], index: 5, kind: input, shape index: {}]
  %s6 = inlined_call_operand.vmem [shape: f32[4,2], index: 6, kind: input, shape index: {}]
  %s7 = inlined_call_operand.vmem [shape: f32[1,2], index: 7, kind: input, shape index: {}]
  %s8 = inlined_call_operand.vmem [shape: bf16[2,4], index: 8, kind: input, shape index: {}]
  %s9 = inlined_call_operand.vmem [shape: f32[1,4], index: 9, kind: input, shape index: {}]
  %s10 = inlined_call_operand.vmem [shape: f32[2,256,4], index: 10, kind: output, shape index: {}]
  %s11 = sld [smem:[#allocation0]]
  $region77: #{tpu_custom_call.1} parent=0
    _
  %s13 = ssub.s32 1, %s11
  %s14 = scalar_select 0, %s13, %s11
  loop: start=0, step=1, limit=6
  $region2: #{tpu_custom_call.1} parent=0 // loop_pre_header
    _
  $region3: #{tpu_custom_call.1} parent=0 // loop_header
    %s16 = sphi 0, %s20
    %p17 = scmp.ge.s32.totalorder %s16, 6
    %s23 = sphi 0, %s35
    %s24 = sphi 0, %s31
    %s25 = sphi 0, %s23
    %s26 = sphi 0, %s24
    %s27 = sphi 0, %s25
    %s28 = sphi 0, %s26
    %s40 = sphi 0, %s42
    %s43 = sphi 0, %s40
    %s44 = sphi 0, %s43
    %s60 = sphi 0, %s44
    %s66 = sphi 0, %s68
    %s69 = sphi 0, %s66
    %s70 = sphi 0, %s69
    %s86 = sphi 0, %s70
    %s90 = sphi 0, %s90
    %s92 = sphi 0, %s90
    %s93 = sphi 0, %s92
    %s107 = sphi 0, %s93
    %s111 = sphi 0, %s111
    %s113 = sphi 0, %s111
    %s114 = sphi 0, %s113
    %s128 = sphi 0, %s114
    %s132 = sphi 0, %s132
    %s134 = sphi 0, %s132
    %s135 = sphi 0, %s134
    %s149 = sphi 0, %s135
    %s153 = sphi 0, %s153
    %s155 = sphi 0, %s153
    %s156 = sphi 0, %s155
    %s170 = sphi 0, %s156
    %s174 = sphi 0, %s174
    %s176 = sphi 0, %s174
    %s177 = sphi 0, %s176
    %s191 = sphi 0, %s177
    %s195 = sphi 0, %s195
    %s197 = sphi 0, %s195
    %s198 = sphi 0, %s197
    %s212 = sphi 0, %s198
    %s216 = sphi 0, %s216
    %s218 = sphi 0, %s216
    %s219 = sphi 0, %s218
    %s233 = sphi 0, %s219
    %s237 = sphi 0, %s237
    %s239 = sphi 0, %s237
    %s240 = sphi 0, %s239
    %s254 = sphi 0, %s240
    %s262 = sphi 0, %s264
    %s265 = sphi 0, %s262
    %s266 = sphi 0, %s265
    %s282 = sphi 0, %s266
  $region4: #{tpu_custom_call.1} parent=0 // loop_header_branch
    %19 = sbr.rel (%p17) target = $region8
  $region5: #{tpu_custom_call.1} parent=0 // loop_body
    %s21 = ssub.s32 %s16, 1
    %s22 = ssub.s32 %s16, 2
    %s29 = sadd.s32 1, %s24
    %p30 = scmp.ge.s32.totalorder %s29, 2
    %s31 = scalar_select %p30, 0, %s29
    %s32 = sadd.s32 1, %s23
    %s33 = scalar_select %p30, %s32, %s23
    %p34 = scmp.ge.s32.totalorder %s33, 2
    %s35 = scalar_select %p34, 0, %s33
    %s36 = ssub.s32 %s23, %s35
    %s37 = ssub.s32 %s24, %s31
    %s38 = sor.u32 %s36, %s37
    %p39 = scmp.eq.s32.totalorder %s38, 0
    %s41 = sadd.s32 %s40, 1
    %s42 = scalar_select %p39, %s40, %s41
    %p45 = pneg %p39
    %p46 = scmp.eq.s32.totalorder %s16, 3
    %p47 = por %p45, %p46
    %p48 = scmp.ne.s32.totalorder %s40, %s43
    %p49 = scmp.eq.s32.totalorder %s16, 0
    %p50 = por %p48, %p49
    %p51 = scmp.ne.s32.totalorder %s40, %s43
    %p52 = scmp.eq.s32.totalorder %s21, 3
    %p53 = por %p51, %p52
    %p54 = scmp.ne.s32.totalorder %s43, %s44
    %p55 = scmp.eq.s32.totalorder %s21, 0
    %p56 = por %p54, %p55
    %p57 = scmp.ne.s32.totalorder %s43, %s44
    %p58 = scmp.eq.s32.totalorder %s22, 3
    %p59 = por %p57, %p58
    %p61 = scmp.ne.s32.totalorder %s44, %s60
    %p62 = scmp.eq.s32.totalorder %s22, 0
    %p63 = por %p61, %p62
    %s64 = ssub.s32 %s23, %s35
    %p65 = scmp.eq.s32.totalorder %s64, 0
    %s67 = sadd.s32 %s66, 1
    %s68 = scalar_select %p65, %s66, %s67
    %p71 = pneg %p65
    %p72 = scmp.eq.s32.totalorder %s16, 3
    %p73 = por %p71, %p72
    %p74 = scmp.ne.s32.totalorder %s66, %s69
    %p75 = scmp.eq.s32.totalorder %s16, 0
    %p76 = por %p74, %p75
    %p77 = scmp.ne.s32.totalorder %s66, %s69
    %p78 = scmp.eq.s32.totalorder %s21, 3
    %p79 = por %p77, %p78
    %p80 = scmp.ne.s32.totalorder %s69, %s70
    %p81 = scmp.eq.s32.totalorder %s21, 0
    %p82 = por %p80, %p81
    %p83 = scmp.ne.s32.totalorder %s69, %s70
    %p84 = scmp.eq.s32.totalorder %s22, 3
    %p85 = por %p83, %p84
    %p87 = scmp.ne.s32.totalorder %s70, %s86
    %p88 = scmp.eq.s32.totalorder %s22, 0
    %p89 = por %p87, %p88
    %s91 = sadd.s32 %s90, 1
    %p94 = scmp.eq.s32.totalorder %s16, 3
    %p95 = scmp.ne.s32.totalorder %s90, %s92
    %p96 = scmp.eq.s32.totalorder %s16, 0
    %p97 = por %p95, %p96
    %p98 = scmp.ne.s32.totalorder %s90, %s92
    %p99 = scmp.eq.s32.totalorder %s21, 3
    %p100 = por %p98, %p99
    %p101 = scmp.ne.s32.totalorder %s92, %s93
    %p102 = scmp.eq.s32.totalorder %s21, 0
    %p103 = por %p101, %p102
    %p104 = scmp.ne.s32.totalorder %s92, %s93
    %p105 = scmp.eq.s32.totalorder %s22, 3
    %p106 = por %p104, %p105
    %p108 = scmp.ne.s32.totalorder %s93, %s107
    %p109 = scmp.eq.s32.totalorder %s22, 0
    %p110 = por %p108, %p109
    %s112 = sadd.s32 %s111, 1
    %p115 = scmp.eq.s32.totalorder %s16, 3
    %p116 = scmp.ne.s32.totalorder %s111, %s113
    %p117 = scmp.eq.s32.totalorder %s16, 0
    %p118 = por %p116, %p117
    %p119 = scmp.ne.s32.totalorder %s111, %s113
    %p120 = scmp.eq.s32.totalorder %s21, 3
    %p121 = por %p119, %p120
    %p122 = scmp.ne.s32.totalorder %s113, %s114
    %p123 = scmp.eq.s32.totalorder %s21, 0
    %p124 = por %p122, %p123
    %p125 = scmp.ne.s32.totalorder %s113, %s114
    %p126 = scmp.eq.s32.totalorder %s22, 3
    %p127 = por %p125, %p126
    %p129 = scmp.ne.s32.totalorder %s114, %s128
    %p130 = scmp.eq.s32.totalorder %s22, 0
    %p131 = por %p129, %p130
    %s133 = sadd.s32 %s132, 1
    %p136 = scmp.eq.s32.totalorder %s16, 3
    %p137 = scmp.ne.s32.totalorder %s132, %s134
    %p138 = scmp.eq.s32.totalorder %s16, 0
    %p139 = por %p137, %p138
    %p140 = scmp.ne.s32.totalorder %s132, %s134
    %p141 = scmp.eq.s32.totalorder %s21, 3
    %p142 = por %p140, %p141
    %p143 = scmp.ne.s32.totalorder %s134, %s135
    %p144 = scmp.eq.s32.totalorder %s21, 0
    %p145 = por %p143, %p144
    %p146 = scmp.ne.s32.totalorder %s134, %s135
    %p147 = scmp.eq.s32.totalorder %s22, 3
    %p148 = por %p146, %p147
    %p150 = scmp.ne.s32.totalorder %s135, %s149
    %p151 = scmp.eq.s32.totalorder %s22, 0
    %p152 = por %p150, %p151
    %s154 = sadd.s32 %s153, 1
    %p157 = scmp.eq.s32.totalorder %s16, 3
    %p158 = scmp.ne.s32.totalorder %s153, %s155
    %p159 = scmp.eq.s32.totalorder %s16, 0
    %p160 = por %p158, %p159
    %p161 = scmp.ne.s32.totalorder %s153, %s155
    %p162 = scmp.eq.s32.totalorder %s21, 3
    %p163 = por %p161, %p162
    %p164 = scmp.ne.s32.totalorder %s155, %s156
    %p165 = scmp.eq.s32.totalorder %s21, 0
    %p166 = por %p164, %p165
    %p167 = scmp.ne.s32.totalorder %s155, %s156
    %p168 = scmp.eq.s32.totalorder %s22, 3
    %p169 = por %p167, %p168
    %p171 = scmp.ne.s32.totalorder %s156, %s170
    %p172 = scmp.eq.s32.totalorder %s22, 0
    %p173 = por %p171, %p172
    %s175 = sadd.s32 %s174, 1
    %p178 = scmp.eq.s32.totalorder %s16, 3
    %p179 = scmp.ne.s32.totalorder %s174, %s176
    %p180 = scmp.eq.s32.totalorder %s16, 0
    %p181 = por %p179, %p180
    %p182 = scmp.ne.s32.totalorder %s174, %s176
    %p183 = scmp.eq.s32.totalorder %s21, 3
    %p184 = por %p182, %p183
    %p185 = scmp.ne.s32.totalorder %s176, %s177
    %p186 = scmp.eq.s32.totalorder %s21, 0
    %p187 = por %p185, %p186
    %p188 = scmp.ne.s32.totalorder %s176, %s177
    %p189 = scmp.eq.s32.totalorder %s22, 3
    %p190 = por %p188, %p189
    %p192 = scmp.ne.s32.totalorder %s177, %s191
    %p193 = scmp.eq.s32.totalorder %s22, 0
    %p194 = por %p192, %p193
    %s196 = sadd.s32 %s195, 1
    %p199 = scmp.eq.s32.totalorder %s16, 3
    %p200 = scmp.ne.s32.totalorder %s195, %s197
    %p201 = scmp.eq.s32.totalorder %s16, 0
    %p202 = por %p200, %p201
    %p203 = scmp.ne.s32.totalorder %s195, %s197
    %p204 = scmp.eq.s32.totalorder %s21, 3
    %p205 = por %p203, %p204
    %p206 = scmp.ne.s32.totalorder %s197, %s198
    %p207 = scmp.eq.s32.totalorder %s21, 0
    %p208 = por %p206, %p207
    %p209 = scmp.ne.s32.totalorder %s197, %s198
    %p210 = scmp.eq.s32.totalorder %s22, 3
    %p211 = por %p209, %p210
    %p213 = scmp.ne.s32.totalorder %s198, %s212
    %p214 = scmp.eq.s32.totalorder %s22, 0
    %p215 = por %p213, %p214
    %s217 = sadd.s32 %s216, 1
    %p220 = scmp.eq.s32.totalorder %s16, 3
    %p221 = scmp.ne.s32.totalorder %s216, %s218
    %p222 = scmp.eq.s32.totalorder %s16, 0
    %p223 = por %p221, %p222
    %p224 = scmp.ne.s32.totalorder %s216, %s218
    %p225 = scmp.eq.s32.totalorder %s21, 3
    %p226 = por %p224, %p225
    %p227 = scmp.ne.s32.totalorder %s218, %s219
    %p228 = scmp.eq.s32.totalorder %s21, 0
    %p229 = por %p227, %p228
    %p230 = scmp.ne.s32.totalorder %s218, %s219
    %p231 = scmp.eq.s32.totalorder %s22, 3
    %p232 = por %p230, %p231
    %p234 = scmp.ne.s32.totalorder %s219, %s233
    %p235 = scmp.eq.s32.totalorder %s22, 0
    %p236 = por %p234, %p235
    %s238 = sadd.s32 %s237, 1
    %p241 = scmp.eq.s32.totalorder %s16, 3
    %p242 = scmp.ne.s32.totalorder %s237, %s239
    %p243 = scmp.eq.s32.totalorder %s16, 0
    %p244 = por %p242, %p243
    %p245 = scmp.ne.s32.totalorder %s237, %s239
    %p246 = scmp.eq.s32.totalorder %s21, 3
    %p247 = por %p245, %p246
    %p248 = scmp.ne.s32.totalorder %s239, %s240
    %p249 = scmp.eq.s32.totalorder %s21, 0
    %p250 = por %p248, %p249
    %p251 = scmp.ne.s32.totalorder %s239, %s240
    %p252 = scmp.eq.s32.totalorder %s22, 3
    %p253 = por %p251, %p252
    %p255 = scmp.ne.s32.totalorder %s240, %s254
    %p256 = scmp.eq.s32.totalorder %s22, 0
    %p257 = por %p255, %p256
    %s258 = ssub.s32 %s23, %s35
    %s259 = ssub.s32 %s24, %s31
    %s260 = sor.u32 %s258, %s259
    %p261 = scmp.eq.s32.totalorder %s260, 0
    %s263 = sadd.s32 %s262, 1
    %s264 = scalar_select %p261, %s262, %s263
    %p267 = pneg %p261
    %p268 = scmp.eq.s32.totalorder %s16, 3
    %p269 = por %p267, %p268
    %p270 = scmp.ne.s32.totalorder %s262, %s265
    %p271 = scmp.eq.s32.totalorder %s16, 0
    %p272 = por %p270, %p271
    %p273 = scmp.ne.s32.totalorder %s262, %s265
    %p274 = scmp.eq.s32.totalorder %s21, 3
    %p275 = por %p273, %p274
    %p276 = scmp.ne.s32.totalorder %s265, %s266
    %p277 = scmp.eq.s32.totalorder %s21, 0
    %p278 = por %p276, %p277
    %p279 = scmp.ne.s32.totalorder %s265, %s266
    %p280 = scmp.eq.s32.totalorder %s22, 3
    %p281 = por %p279, %p280
    %p283 = scmp.ne.s32.totalorder %s266, %s282
    %p284 = scmp.eq.s32.totalorder %s22, 0
    %p285 = por %p283, %p284
    %p286 = scmp.le.s32.totalorder 1, %s16
    %p287 = scmp.lt.s32.totalorder %s16, 5
    %p288 = pnand %p286, %p287
    %p289 = pneg %p288
    // Predicated region
    $region9: #{tpu_custom_call.1} parent=5 // pred_check
      _
    $region10: #{tpu_custom_call.1} parent=5 // pred_check_branch
      %291 = sbr.rel (%p288) target = $region12
    $region11: #{tpu_custom_call.1} parent=5 // pred_region
      %s292 = ssub.s32 %s16, 1
      // Predicated region
      $region13: #{tpu_custom_call.1} parent=11 // pred_check
        %p293 = pneg %p103
      $region14: #{tpu_custom_call.1} parent=11 // pred_check_branch
        %295 = sbr.rel (%p293) target = $region16
      $region15: #{tpu_custom_call.1} parent=11 // pred_region
        _
      $region16: #{tpu_custom_call.1} parent=11 // pred_fallthru
        _
      // Predicated region
      $region17: #{tpu_custom_call.1} parent=11 // pred_check
        %p296 = pneg %p124
      $region18: #{tpu_custom_call.1} parent=11 // pred_check_branch
        %298 = sbr.rel (%p296) target = $region20
      $region19: #{tpu_custom_call.1} parent=11 // pred_region
        _
      $region20: #{tpu_custom_call.1} parent=11 // pred_fallthru
        _
      // Predicated region
      $region21: #{tpu_custom_call.1} parent=11 // pred_check
        %p299 = pneg %p145
      $region22: #{tpu_custom_call.1} parent=11 // pred_check_branch
        %301 = sbr.rel (%p299) target = $region24
      $region23: #{tpu_custom_call.1} parent=11 // pred_region
        _
      $region24: #{tpu_custom_call.1} parent=11 // pred_fallthru
        _
      // Predicated region
      $region25: #{tpu_custom_call.1} parent=11 // pred_check
        %p302 = pneg %p166
      $region26: #{tpu_custom_call.1} parent=11 // pred_check_branch
        %304 = sbr.rel (%p302) target = $region28
      $region27: #{tpu_custom_call.1} parent=11 // pred_region
        _
      $region28: #{tpu_custom_call.1} parent=11 // pred_fallthru
        _
      // Predicated region
      $region29: #{tpu_custom_call.1} parent=11 // pred_check
        %p305 = pneg %p187
      $region30: #{tpu_custom_call.1} parent=11 // pred_check_branch
        %307 = sbr.rel (%p305) target = $region32
      $region31: #{tpu_custom_call.1} parent=11 // pred_region
        _
      $region32: #{tpu_custom_call.1} parent=11 // pred_fallthru
        _
      // Predicated region
      $region33: #{tpu_custom_call.1} parent=11 // pred_check
        %p308 = pneg %p208
      $region34: #{tpu_custom_call.1} parent=11 // pred_check_branch
        %310 = sbr.rel (%p308) target = $region36
      $region35: #{tpu_custom_call.1} parent=11 // pred_region
        _
      $region36: #{tpu_custom_call.1} parent=11 // pred_fallthru
        _
      // Predicated region
      $region37: #{tpu_custom_call.1} parent=11 // pred_check
        %p311 = pneg %p229
      $region38: #{tpu_custom_call.1} parent=11 // pred_check_branch
        %313 = sbr.rel (%p311) target = $region40
      $region39: #{tpu_custom_call.1} parent=11 // pred_region
        _
      $region40: #{tpu_custom_call.1} parent=11 // pred_fallthru
        _
      // Predicated region
      $region41: #{tpu_custom_call.1} parent=11 // pred_check
        %p314 = pneg %p250
      $region42: #{tpu_custom_call.1} parent=11 // pred_check_branch
        %316 = sbr.rel (%p314) target = $region44
      $region43: #{tpu_custom_call.1} parent=11 // pred_region
        _
      $region44: #{tpu_custom_call.1} parent=11 // pred_fallthru
        _
    $region12: #{tpu_custom_call.1} parent=5 // pred_fallthru
      _
    %p317 = scmp.lt.s32.totalorder %s16, 4
    // Predicated region
    $region45: #{tpu_custom_call.1} parent=5 // pred_check
      %p318 = pneg %p317
    $region46: #{tpu_custom_call.1} parent=5 // pred_check_branch
      %320 = sbr.rel (%p318) target = $region48
    $region47: #{tpu_custom_call.1} parent=5 // pred_region
      // Predicated region
      $region49: #{tpu_custom_call.1} parent=47 // pred_check
        %p321 = pneg %p50
      $region50: #{tpu_custom_call.1} parent=47 // pred_check_branch
        %323 = sbr.rel (%p321) target = $region52
      $region51: #{tpu_custom_call.1} parent=47 // pred_region
        %s324 = smul.u32 16, %s24
        %p325 = scmp.lt.s32.totalorder %s23, 1
        %s326 = scalar_select %p325, %s23, 1
        %p327 = scmp.lt.s32.totalorder %s324, 31
        %s328 = scalar_select %p327, %s324, 31
        %s329 = smul.addr %s326, 32
        %s330 = sadd.s32 %s328, %s329
        %s331 = smul.addr %s330, 8
        %s332 = scalar_lea.vmem %s0, %s331
        %s333 = smul.u32 16, %s24
      $region52: #{tpu_custom_call.1} parent=47 // pred_fallthru
        _
      // Predicated region
      $region53: #{tpu_custom_call.1} parent=47 // pred_check
        %p334 = pneg %p76
      $region54: #{tpu_custom_call.1} parent=47 // pred_check_branch
        %336 = sbr.rel (%p334) target = $region56
      $region55: #{tpu_custom_call.1} parent=47 // pred_region
        %p337 = scmp.lt.s32.totalorder %s23, 1
        %s338 = scalar_select %p337, %s23, 1
        %s339 = smul.addr %s338, 32
        %s340 = smul.addr %s339, 8
        %s341 = scalar_lea.vmem %s1, %s340
      $region56: #{tpu_custom_call.1} parent=47 // pred_fallthru
        _
    $region48: #{tpu_custom_call.1} parent=5 // pred_fallthru
      _
    %p342 = scmp.le.s32.totalorder 1, %s16
    %p343 = scmp.lt.s32.totalorder %s16, 5
    %p344 = pnand %p342, %p343
    %p345 = pneg %p344
    // Predicated region
    $region57: #{tpu_custom_call.1} parent=5 // pred_check
      _
    $region58: #{tpu_custom_call.1} parent=5 // pred_check_branch
      %347 = sbr.rel (%p344) target = $region60
    $region59: #{tpu_custom_call.1} parent=5 // pred_region
      %s348 = ssub.s32 %s16, 1
      %s349 = smul.u32 16, %s26
      %p350 = scmp.lt.s32.totalorder %s25, 1
      %s351 = scalar_select %p350, %s25, 1
      %p352 = scmp.lt.s32.totalorder %s349, 31
      %s353 = scalar_select %p352, %s349, 31
      %s354 = smul.addr %s351, 32
      %s355 = sadd.s32 %s353, %s354
      %s356 = smul.addr %s355, 8
      %s357 = scalar_lea.vmem %s0, %s356
      %p358 = pneg %p56
      %p359 = pneg %p53
      %p360 = scmp.lt.s32.totalorder %s25, 1
      %s361 = scalar_select %p360, %s25, 1
      %s362 = smul.addr %s361, 32
      %s363 = smul.addr %s362, 8
      %s364 = scalar_lea.vmem %s1, %s363
      %p365 = pneg %p82
      %p366 = pneg %p79
      %p367 = pneg %p103
      %p368 = pneg %p100
      %p369 = pneg %p124
      %p370 = pneg %p121
      %p371 = pneg %p145
      %p372 = pneg %p142
      %p373 = pneg %p166
      %p374 = pneg %p163
      %p375 = pneg %p187
      %p376 = pneg %p184
      %p377 = pneg %p208
      %p378 = pneg %p205
      %p379 = pneg %p229
      %p380 = pneg %p226
      %p381 = pneg %p250
      %p382 = pneg %p247
      %p383 = pneg %p278
      %p384 = pneg %p275
      %s385 = smul.u32 16, %s26
      %p386 = scmp.lt.s32.totalorder %s25, 1
      %s387 = scalar_select %p386, %s25, 1
      %p388 = scmp.lt.s32.totalorder %s385, 31
      %s389 = scalar_select %p388, %s385, 31
      %s390 = smul.addr %s387, 32
      %s391 = sadd.s32 %s389, %s390
      %s392 = smul.addr %s391, 8
      %s393 = scalar_lea.vmem %s10, %s392
      %s394 = smul.u32 16, %s26
      %p395 = scmp.lt.s32.totalorder %s25, 1
      %s396 = scalar_select %p395, %s25, 1
      %p397 = scmp.lt.s32.totalorder %s394, 31
      %s398 = scalar_select %p397, %s394, 31
      %s399 = smul.addr %s396, 32
      %s400 = sadd.s32 %s398, %s399
      %s401 = smul.addr %s400, 8
      %s402 = scalar_lea.vmem %s0, %s401
      %s403 = smul.u32 16, %s26
      %p404 = scmp.lt.s32.totalorder %s25, 1
      %s405 = scalar_select %p404, %s25, 1
      %s406 = smul.addr %s405, 32
      %s407 = smul.addr %s406, 8
      %s408 = scalar_lea.vmem %s1, %s407
      %s409 = smul.u32 16, %s26
      %p410 = scmp.lt.s32.totalorder %s25, 1
      %s411 = scalar_select %p410, %s25, 1
      %p412 = scmp.lt.s32.totalorder %s409, 31
      %s413 = scalar_select %p412, %s409, 31
      %s414 = smul.addr %s411, 32
      %s415 = sadd.s32 %s413, %s414
      %s416 = smul.addr %s415, 8
      %s417 = scalar_lea.vmem %s10, %s416
      %s418 = smul.u32 16, %s26
      %p420 = scmp.eq.s32.totalorder %s26, 0
      // Predicated region
      $region61: #{tpu_custom_call.1} parent=59 // pred_check
        %p421 = pneg %p420
      $region62: #{tpu_custom_call.1} parent=59 // pred_check_branch
        %423 = sbr.rel (%p421) target = $region64
      $region63: #{tpu_custom_call.1} parent=59 // pred_region
        %v424 = vld [vmem:[%s408] sm:$0xff]
        %v425 = vld [vmem:[%s408 + $0x8] sm:$0xff]
        %v426 = vld [vmem:[%s408 + $0x10] sm:$0xff]
        %v427 = vld [vmem:[%s408 + $0x18] sm:$0xff]
        %v428 = vld [vmem:[%s408 + $0x20] sm:$0xff]
        %v429 = vld [vmem:[%s408 + $0x28] sm:$0xff]
        %v430 = vld [vmem:[%s408 + $0x30] sm:$0xff]
        %v431 = vld [vmem:[%s408 + $0x38] sm:$0xff]
        %v432 = vld [vmem:[%s408 + $0x40] sm:$0xff]
        %v433 = vld [vmem:[%s408 + $0x48] sm:$0xff]
        %v434 = vld [vmem:[%s408 + $0x50] sm:$0xff]
        %v435 = vld [vmem:[%s408 + $0x58] sm:$0xff]
        %v436 = vld [vmem:[%s408 + $0x60] sm:$0xff]
        %v437 = vld [vmem:[%s408 + $0x68] sm:$0xff]
        %v438 = vld [vmem:[%s408 + $0x70] sm:$0xff]
        %v439 = vld [vmem:[%s408 + $0x78] sm:$0xff]
        %v440 = vld [vmem:[%s408 + $0x80] sm:$0xff]
        %v441 = vld [vmem:[%s408 + $0x88] sm:$0xff]
        %v442 = vld [vmem:[%s408 + $0x90] sm:$0xff]
        %v443 = vld [vmem:[%s408 + $0x98] sm:$0xff]
        %v444 = vld [vmem:[%s408 + $0xa0] sm:$0xff]
        %v445 = vld [vmem:[%s408 + $0xa8] sm:$0xff]
        %v446 = vld [vmem:[%s408 + $0xb0] sm:$0xff]
        %v447 = vld [vmem:[%s408 + $0xb8] sm:$0xff]
        %v448 = vld [vmem:[%s408 + $0xc0] sm:$0xff]
        %v449 = vld [vmem:[%s408 + $0xc8] sm:$0xff]
        %v450 = vld [vmem:[%s408 + $0xd0] sm:$0xff]
        %v451 = vld [vmem:[%s408 + $0xd8] sm:$0xff]
        %v452 = vld [vmem:[%s408 + $0xe0] sm:$0xff]
        %v453 = vld [vmem:[%s408 + $0xe8] sm:$0xff]
        %v454 = vld [vmem:[%s408 + $0xf0] sm:$0xff]
        %v455 = vld [vmem:[%s408 + $0xf8] sm:$0xff]
        %v456 = vpack.c.bf16 %v425, %v424
        %v457 = vpack.c.bf16 %v427, %v426
        %v458 = vpack.c.bf16 %v429, %v428
        %v459 = vpack.c.bf16 %v431, %v430
        %v460 = vpack.c.bf16 %v433, %v432
        %v461 = vpack.c.bf16 %v435, %v434
        %v462 = vpack.c.bf16 %v437, %v436
        %v463 = vpack.c.bf16 %v439, %v438
        %v464 = vpack.c.bf16 %v441, %v440
        %v465 = vpack.c.bf16 %v443, %v442
        %v466 = vpack.c.bf16 %v445, %v444
        %v467 = vpack.c.bf16 %v447, %v446
        %v468 = vpack.c.bf16 %v449, %v448
        %v469 = vpack.c.bf16 %v451, %v450
        %v470 = vpack.c.bf16 %v453, %v452
        %v471 = vpack.c.bf16 %v455, %v454
        %v472 = vld [vmem:[%s4] sm:$0x3]
        %vm473 = vcmask 31744
        %v475 = vsel %vm473, %v456, 0
        %v478 = vsel %vm473, %v457, 0
        %v481 = vsel %vm473, %v458, 0
        %v484 = vsel %vm473, %v459, 0
        %v487 = vsel %vm473, %v460, 0
        %v490 = vsel %vm473, %v461, 0
        %v493 = vsel %vm473, %v462, 0
        %v496 = vsel %vm473, %v463, 0
        %v499 = vsel %vm473, %v464, 0
        %v502 = vsel %vm473, %v465, 0
        %v505 = vsel %vm473, %v466, 0
        %v508 = vsel %vm473, %v467, 0
        %v511 = vsel %vm473, %v468, 0
        %v514 = vsel %vm473, %v469, 0
        %v517 = vsel %vm473, %v470, 0
        %v520 = vsel %vm473, %v471, 0
        %vm522 = vcmask 1041408
        %v524 = vsel %vm522, %v472, 0
        %526 = vmatprep.subr.bf16.mxu0 0
        %527 = vmatpush1.bf16.msra.mxu0 %v524
        %528 = vmatprep.subr.bf16.mxu0 0
        %529 = vmatpush1.bf16.msra.mxu0 0
        %530 = vmatprep.subr.bf16.mxu0 0
        %531 = vmatpush1.bf16.msra.mxu0 0
        %532 = vmatprep.subr.bf16.mxu0 0
        %533 = vmatpush1.bf16.msra.mxu0 0
        %534 = vmatprep.subr.bf16.mxu0 0
        %535 = vmatpush1.bf16.msra.mxu0 0
        %536 = vmatprep.subr.bf16.mxu0 0
        %537 = vmatpush1.bf16.msra.mxu0 0
        %538 = vmatprep.subr.bf16.mxu0 0
        %539 = vmatpush1.bf16.msra.mxu0 0
        %540 = vmatprep.subr.bf16.mxu0 0
        %541 = vmatpush1.bf16.msra.mxu0 0
        %542 = vmatprep.subr.bf16.mxu0 0
        %543 = vmatpush1.bf16.msra.mxu0 0
        %544 = vmatprep.subr.bf16.mxu0 0
        %545 = vmatpush1.bf16.msra.mxu0 0
        %546 = vmatprep.subr.bf16.mxu0 0
        %547 = vmatpush1.bf16.msra.mxu0 0
        %548 = vmatprep.subr.bf16.mxu0 0
        %549 = vmatpush1.bf16.msra.mxu0 0
        %550 = vmatprep.subr.bf16.mxu0 0
        %551 = vmatpush1.bf16.msra.mxu0 0
        %552 = vmatprep.subr.bf16.mxu0 0
        %553 = vmatpush1.bf16.msra.mxu0 0
        %554 = vmatprep.subr.bf16.mxu0 0
        %555 = vmatpush1.bf16.msra.mxu0 0
        %556 = vmatprep.subr.bf16.mxu0 0
        %557 = vmatpush1.bf16.msra.mxu0 0
        %558 = vmatprep.mubr.bf16.mxu0 0
        %559 = vmatmul.mubr.bf16.gmra.mrb[0].mxu0 %v475
        %v560 = vpop.f32.mrb[0].mxu0
        %v561 = vadd.f32 0.0, %v560
        %v562 = vpop.f32.mrb[0].mxu0
        %v563 = vpop.f32.mrb[0].mxu0
        %v564 = vadd.f32 0.0, %v563
        %v565 = vpop.f32.mrb[0].mxu0
        %566 = vmatprep.mubr.bf16.mxu0 0
        %567 = vmatmul.mubr.bf16.gmra.mrb[0].mxu0 %v478
        %v568 = vpop.f32.mrb[0].mxu0
        %v569 = vadd.f32 0.0, %v568
        %v570 = vpop.f32.mrb[0].mxu0
        %v571 = vpop.f32.mrb[0].mxu0
        %v572 = vadd.f32 0.0, %v571
        %v573 = vpop.f32.mrb[0].mxu0
        %574 = vmatprep.mubr.bf16.mxu0 0
        %575 = vmatmul.mubr.bf16.gmra.mrb[0].mxu0 %v481
        %v576 = vpop.f32.mrb[0].mxu0
        %v577 = vadd.f32 0.0, %v576
        %v578 = vpop.f32.mrb[0].mxu0
        %v579 = vpop.f32.mrb[0].mxu0
        %v580 = vadd.f32 0.0, %v579
        %v581 = vpop.f32.mrb[0].mxu0
        %582 = vmatprep.mubr.bf16.mxu0 0
        %583 = vmatmul.mubr.bf16.gmra.mrb[0].mxu0 %v484
        %v584 = vpop.f32.mrb[0].mxu0
        %v585 = vadd.f32 0.0, %v584
        %v586 = vpop.f32.mrb[0].mxu0
        %v587 = vpop.f32.mrb[0].mxu0
        %v588 = vadd.f32 0.0, %v587
        %v589 = vpop.f32.mrb[0].mxu0
        %590 = vmatprep.mubr.bf16.mxu0 0
        %591 = vmatmul.mubr.bf16.gmra.mrb[0].mxu0 %v487
        %v592 = vpop.f32.mrb[0].mxu0
        %v593 = vadd.f32 0.0, %v592
        %v594 = vpop.f32.mrb[0].mxu0
        %v595 = vpop.f32.mrb[0].mxu0
        %v596 = vadd.f32 0.0, %v595
        %v597 = vpop.f32.mrb[0].mxu0
        %598 = vmatprep.mubr.bf16.mxu0 0
        %599 = vmatmul.mubr.bf16.gmra.mrb[0].mxu0 %v490
        %v600 = vpop.f32.mrb[0].mxu0
        %v601 = vadd.f32 0.0, %v600
        %v602 = vpop.f32.mrb[0].mxu0
        %v603 = vpop.f32.mrb[0].mxu0
        %v604 = vadd.f32 0.0, %v603
        %v605 = vpop.f32.mrb[0].mxu0
        %606 = vmatprep.mubr.bf16.mxu0 0
        %607 = vmatmul.mubr.bf16.gmra.mrb[0].mxu0 %v493
        %v608 = vpop.f32.mrb[0].mxu0
        %v609 = vadd.f32 0.0, %v608
        %v610 = vpop.f32.mrb[0].mxu0
        %v611 = vpop.f32.mrb[0].mxu0
        %v612 = vadd.f32 0.0, %v611
        %v613 = vpop.f32.mrb[0].mxu0
        %614 = vmatprep.mubr.bf16.mxu0 0
        %615 = vmatmul.mubr.bf16.gmra.mrb[0].mxu0 %v496
        %v616 = vpop.f32.mrb[0].mxu0
        %v617 = vadd.f32 0.0, %v616
        %v618 = vpop.f32.mrb[0].mxu0
        %v619 = vpop.f32.mrb[0].mxu0
        %v620 = vadd.f32 0.0, %v619
        %v621 = vpop.f32.mrb[0].mxu0
        %622 = vmatprep.mubr.bf16.mxu0 0
        %623 = vmatmul.mubr.bf16.gmra.mrb[0].mxu0 %v499
        %v624 = vpop.f32.mrb[0].mxu0
        %v625 = vadd.f32 0.0, %v624
        %v626 = vpop.f32.mrb[0].mxu0
        %v627 = vpop.f32.mrb[0].mxu0
        %v628 = vadd.f32 0.0, %v627
        %v629 = vpop.f32.mrb[0].mxu0
        %630 = vmatprep.mubr.bf16.mxu0 0
        %631 = vmatmul.mubr.bf16.gmra.mrb[0].mxu0 %v502
        %v632 = vpop.f32.mrb[0].mxu0
        %v633 = vadd.f32 0.0, %v632
        %v634 = vpop.f32.mrb[0].mxu0
        %v635 = vpop.f32.mrb[0].mxu0
        %v636 = vadd.f32 0.0, %v635
        %v637 = vpop.f32.mrb[0].mxu0
        %638 = vmatprep.mubr.bf16.mxu0 0
        %639 = vmatmul.mubr.bf16.gmra.mrb[0].mxu0 %v505
        %v640 = vpop.f32.mrb[0].mxu0
        %v641 = vadd.f32 0.0, %v640
        %v642 = vpop.f32.mrb[0].mxu0
        %v643 = vpop.f32.mrb[0].mxu0
        %v644 = vadd.f32 0.0, %v643
        %v645 = vpop.f32.mrb[0].mxu0
        %646 = vmatprep.mubr.bf16.mxu0 0
        %647 = vmatmul.mubr.bf16.gmra.mrb[0].mxu0 %v508
        %v648 = vpop.f32.mrb[0].mxu0
        %v649 = vadd.f32 0.0, %v648
        %v650 = vpop.f32.mrb[0].mxu0
        %v651 = vpop.f32.mrb[0].mxu0
        %v652 = vadd.f32 0.0, %v651
        %v653 = vpop.f32.mrb[0].mxu0
        %654 = vmatprep.mubr.bf16.mxu0 0
        %655 = vmatmul.mubr.bf16.gmra.mrb[0].mxu0 %v511
        %v656 = vpop.f32.mrb[0].mxu0
        %v657 = vadd.f32 0.0, %v656
        %v658 = vpop.f32.mrb[0].mxu0
        %v659 = vpop.f32.mrb[0].mxu0
        %v660 = vadd.f32 0.0, %v659
        %v661 = vpop.f32.mrb[0].mxu0
        %662 = vmatprep.mubr.bf16.mxu0 0
        %663 = vmatmul.mubr.bf16.gmra.mrb[0].mxu0 %v514
        %v664 = vpop.f32.mrb[0].mxu0
        %v665 = vadd.f32 0.0, %v664
        %v666 = vpop.f32.mrb[0].mxu0
        %v667 = vpop.f32.mrb[0].mxu0
        %v668 = vadd.f32 0.0, %v667
        %v669 = vpop.f32.mrb[0].mxu0
        %670 = vmatprep.mubr.bf16.mxu0 0
        %671 = vmatmul.mubr.bf16.gmra.mrb[0].mxu0 %v517
        %v672 = vpop.f32.mrb[0].mxu0
        %v673 = vadd.f32 0.0, %v672
        %v674 = vpop.f32.mrb[0].mxu0
        %v675 = vpop.f32.mrb[0].mxu0
        %v676 = vadd.f32 0.0, %v675
        %v677 = vpop.f32.mrb[0].mxu0
        %678 = vmatprep.mubr.bf16.mxu0 0
        %679 = vmatmul.mubr.bf16.gmra.mrb[0].mxu0 %v520
        %v680 = vpop.f32.mrb[0].mxu0
        %v681 = vadd.f32 0.0, %v680
        %v682 = vpop.f32.mrb[0].mxu0
        %v683 = vpop.f32.mrb[0].mxu0
        %v684 = vadd.f32 0.0, %v683
        %v685 = vpop.f32.mrb[0].mxu0
        %686 = vdwg.mxu0
        %v687 = vld [vmem:[%s6] sm:$0xf]
        %v689 = vsel %vm473, %v424, 0
        %v692 = vsel %vm473, %v425, 0
        %v695 = vsel %vm473, %v426, 0
        %v698 = vsel %vm473, %v427, 0
        %v701 = vsel %vm473, %v428, 0
        %v704 = vsel %vm473, %v429, 0
        %v707 = vsel %vm473, %v430, 0
        %v710 = vsel %vm473, %v431, 0
        %v713 = vsel %vm473, %v432, 0
        %v716 = vsel %vm473, %v433, 0
        %v719 = vsel %vm473, %v434, 0
        %v722 = vsel %vm473, %v435, 0
        %v725 = vsel %vm473, %v436, 0
        %v728 = vsel %vm473, %v437, 0
        %v731 = vsel %vm473, %v438, 0
        %v734 = vsel %vm473, %v439, 0
        %v737 = vsel %vm473, %v440, 0
        %v740 = vsel %vm473, %v441, 0
        %v743 = vsel %vm473, %v442, 0
        %v746 = vsel %vm473, %v443, 0
        %v749 = vsel %vm473, %v444, 0
        %v752 = vsel %vm473, %v445, 0
        %v755 = vsel %vm473, %v446, 0
        %v758 = vsel %vm473, %v447, 0
        %v761 = vsel %vm473, %v448, 0
        %v764 = vsel %vm473, %v449, 0
        %v767 = vsel %vm473, %v450, 0
        %v770 = vsel %vm473, %v451, 0
        %v773 = vsel %vm473, %v452, 0
        %v776 = vsel %vm473, %v453, 0
        %v779 = vsel %vm473, %v454, 0
        %v782 = vsel %vm473, %v455, 0
        %vm784 = vcmask 1043456
        %v786 = vsel %vm784, %v687, 0
        %788 = vmatprep.subr.mxu0 0.0
        %789 = vmatpush1.msra.mxu0 %v786
        %790 = vmatprep.subr.mxu0 0.0
        %791 = vmatpush1.msra.mxu0 0.0
        %792 = vmatprep.subr.mxu0 0.0
        %793 = vmatpush1.msra.mxu0 0.0
        %794 = vmatprep.subr.mxu0 0.0
        %795 = vmatpush1.msra.mxu0 0.0
        %796 = vmatprep.subr.mxu0 0.0
        %797 = vmatpush1.msra.mxu0 0.0
        %798 = vmatprep.subr.mxu0 0.0
        %799 = vmatpush1.msra.mxu0 0.0
        %800 = vmatprep.subr.mxu0 0.0
        %801 = vmatpush1.msra.mxu0 0.0
        %802 = vmatprep.subr.mxu0 0.0
        %803 = vmatpush1.msra.mxu0 0.0
        %804 = vmatprep.subr.mxu0 0.0
        %805 = vmatpush1.msra.mxu0 0.0
        %806 = vmatprep.subr.mxu0 0.0
        %807 = vmatpush1.msra.mxu0 0.0
        %808 = vmatprep.subr.mxu0 0.0
        %809 = vmatpush1.msra.mxu0 0.0
        %810 = vmatprep.subr.mxu0 0.0
        %811 = vmatpush1.msra.mxu0 0.0
        %812 = vmatprep.subr.mxu0 0.0
        %813 = vmatpush1.msra.mxu0 0.0
        %814 = vmatprep.subr.mxu0 0.0
        %815 = vmatpush1.msra.mxu0 0.0
        %816 = vmatprep.subr.mxu0 0.0
        %817 = vmatpush1.msra.mxu0 0.0
        %818 = vmatprep.subr.mxu0 0.0
        %819 = vmatpush1.msra.mxu0 0.0
        %820 = vmatprep.subr.mxu0 0.0
        %821 = vmatpush1.msra.mxu0 0.0
        %822 = vmatprep.subr.mxu0 0.0
        %823 = vmatpush1.msra.mxu0 0.0
        %824 = vmatprep.subr.mxu0 0.0
        %825 = vmatpush1.msra.mxu0 0.0
        %826 = vmatprep.subr.mxu0 0.0
        %827 = vmatpush1.msra.mxu0 0.0
        %828 = vmatprep.subr.mxu0 0.0
        %829 = vmatpush1.msra.mxu0 0.0
        %830 = vmatprep.subr.mxu0 0.0
        %831 = vmatpush1.msra.mxu0 0.0
        %832 = vmatprep.subr.mxu0 0.0
        %833 = vmatpush1.msra.mxu0 0.0
        %834 = vmatprep.subr.mxu0 0.0
        %835 = vmatpush1.msra.mxu0 0.0
        %836 = vmatprep.subr.mxu0 0.0
        %837 = vmatpush1.msra.mxu0 0.0
        %838 = vmatprep.subr.mxu0 0.0
        %839 = vmatpush1.msra.mxu0 0.0
        %840 = vmatprep.subr.mxu0 0.0
        %841 = vmatpush1.msra.mxu0 0.0
        %842 = vmatprep.subr.mxu0 0.0
        %843 = vmatpush1.msra.mxu0 0.0
        %844 = vmatprep.subr.mxu0 0.0
        %845 = vmatpush1.msra.mxu0 0.0
        %846 = vmatprep.subr.mxu0 0.0
        %847 = vmatpush1.msra.mxu0 0.0
        %848 = vmatprep.subr.mxu0 0.0
        %849 = vmatpush1.msra.mxu0 0.0
        %850 = vmatprep.subr.mxu0 0.0
        %851 = vmatpush1.msra.mxu0 0.0
        %852 = vmatprep.mubr.f32.mxu0 0.0
        %853 = vmatmul.mubr.f32.gmra.mrb[0].mxu0 %v689
        %v854 = vpop.f32.mrb[0].mxu0
        %v855 = vadd.f32 0.0, %v854
        %v856 = vpop.f32.mrb[0].mxu0
        %857 = vmatprep.mubr.f32.mxu0 0.0
        %858 = vmatmul.mubr.f32.gmra.mrb[0].mxu0 %v692
        %v859 = vpop.f32.mrb[0].mxu0
        %v860 = vadd.f32 0.0, %v859
        %v861 = vpop.f32.mrb[0].mxu0
        %862 = vmatprep.mubr.f32.mxu0 0.0
        %863 = vmatmul.mubr.f32.gmra.mrb[0].mxu0 %v695
        %v864 = vpop.f32.mrb[0].mxu0
        %v865 = vadd.f32 0.0, %v864
        %v866 = vpop.f32.mrb[0].mxu0
        %867 = vmatprep.mubr.f32.mxu0 0.0
        %868 = vmatmul.mubr.f32.gmra.mrb[0].mxu0 %v698
        %v869 = vpop.f32.mrb[0].mxu0
        %v870 = vadd.f32 0.0, %v869
        %v871 = vpop.f32.mrb[0].mxu0
        %872 = vmatprep.mubr.f32.mxu0 0.0
        %873 = vmatmul.mubr.f32.gmra.mrb[0].mxu0 %v701
        %v874 = vpop.f32.mrb[0].mxu0
        %v875 = vadd.f32 0.0, %v874
        %v876 = vpop.f32.mrb[0].mxu0
        %877 = vmatprep.mubr.f32.mxu0 0.0
        %878 = vmatmul.mubr.f32.gmra.mrb[0].mxu0 %v704
        %v879 = vpop.f32.mrb[0].mxu0
        %v880 = vadd.f32 0.0, %v879
        %v881 = vpop.f32.mrb[0].mxu0
        %882 = vmatprep.mubr.f32.mxu0 0.0
        %883 = vmatmul.mubr.f32.gmra.mrb[0].mxu0 %v707
        %v884 = vpop.f32.mrb[0].mxu0
        %v885 = vadd.f32 0.0, %v884
        %v886 = vpop.f32.mrb[0].mxu0
        %887 = vmatprep.mubr.f32.mxu0 0.0
        %888 = vmatmul.mubr.f32.gmra.mrb[0].mxu0 %v710
        %v889 = vpop.f32.mrb[0].mxu0
        %v890 = vadd.f32 0.0, %v889
        %v891 = vpop.f32.mrb[0].mxu0
        %892 = vmatprep.mubr.f32.mxu0 0.0
        %893 = vmatmul.mubr.f32.gmra.mrb[0].mxu0 %v713
        %v894 = vpop.f32.mrb[0].mxu0
        %v895 = vadd.f32 0.0, %v894
        %v896 = vpop.f32.mrb[0].mxu0
        %897 = vmatprep.mubr.f32.mxu0 0.0
        %898 = vmatmul.mubr.f32.gmra.mrb[0].mxu0 %v716
        %v899 = vpop.f32.mrb[0].mxu0
        %v900 = vadd.f32 0.0, %v899
        %v901 = vpop.f32.mrb[0].mxu0
        %902 = vmatprep.mubr.f32.mxu0 0.0
        %903 = vmatmul.mubr.f32.gmra.mrb[0].mxu0 %v719
        %v904 = vpop.f32.mrb[0].mxu0
        %v905 = vadd.f32 0.0, %v904
        %v906 = vpop.f32.mrb[0].mxu0
        %907 = vmatprep.mubr.f32.mxu0 0.0
        %908 = vmatmul.mubr.f32.gmra.mrb[0].mxu0 %v722
        %v909 = vpop.f32.mrb[0].mxu0
        %v910 = vadd.f32 0.0, %v909
        %v911 = vpop.f32.mrb[0].mxu0
        %912 = vmatprep.mubr.f32.mxu0 0.0
        %913 = vmatmul.mubr.f32.gmra.mrb[0].mxu0 %v725
        %v914 = vpop.f32.mrb[0].mxu0
        %v915 = vadd.f32 0.0, %v914
        %v916 = vpop.f32.mrb[0].mxu0
        %917 = vmatprep.mubr.f32.mxu0 0.0
        %918 = vmatmul.mubr.f32.gmra.mrb[0].mxu0 %v728
        %v919 = vpop.f32.mrb[0].mxu0
        %v920 = vadd.f32 0.0, %v919
        %v921 = vpop.f32.mrb[0].mxu0
        %922 = vmatprep.mubr.f32.mxu0 0.0
        %923 = vmatmul.mubr.f32.gmra.mrb[0].mxu0 %v731
        %v924 = vpop.f32.mrb[0].mxu0
        %v925 = vadd.f32 0.0, %v924
        %v926 = vpop.f32.mrb[0].mxu0
        %927 = vmatprep.mubr.f32.mxu0 0.0
        %928 = vmatmul.mubr.f32.gmra.mrb[0].mxu0 %v734
        %v929 = vpop.f32.mrb[0].mxu0
        %v930 = vadd.f32 0.0, %v929
        %v931 = vpop.f32.mrb[0].mxu0
        %932 = vmatprep.mubr.f32.mxu0 0.0
        %933 = vmatmul.mubr.f32.gmra.mrb[0].mxu0 %v737
        %v934 = vpop.f32.mrb[0].mxu0
        %v935 = vadd.f32 0.0, %v934
        %v936 = vpop.f32.mrb[0].mxu0
        %937 = vmatprep.mubr.f32.mxu0 0.0
        %938 = vmatmul.mubr.f32.gmra.mrb[0].mxu0 %v740
        %v939 = vpop.f32.mrb[0].mxu0
        %v940 = vadd.f32 0.0, %v939
        %v941 = vpop.f32.mrb[0].mxu0
        %942 = vmatprep.mubr.f32.mxu0 0.0
        %943 = vmatmul.mubr.f32.gmra.mrb[0].mxu0 %v743
        %v944 = vpop.f32.mrb[0].mxu0
        %v945 = vadd.f32 0.0, %v944
        %v946 = vpop.f32.mrb[0].mxu0
        %947 = vmatprep.mubr.f32.mxu0 0.0
        %948 = vmatmul.mubr.f32.gmra.mrb[0].mxu0 %v746
        %v949 = vpop.f32.mrb[0].mxu0
        %v950 = vadd.f32 0.0, %v949
        %v951 = vpop.f32.mrb[0].mxu0
        %952 = vmatprep.mubr.f32.mxu0 0.0
        %953 = vmatmul.mubr.f32.gmra.mrb[0].mxu0 %v749
        %v954 = vpop.f32.mrb[0].mxu0
        %v955 = vadd.f32 0.0, %v954
        %v956 = vpop.f32.mrb[0].mxu0
        %957 = vmatprep.mubr.f32.mxu0 0.0
        %958 = vmatmul.mubr.f32.gmra.mrb[0].mxu0 %v752
        %v959 = vpop.f32.mrb[0].mxu0
        %v960 = vadd.f32 0.0, %v959
        %v961 = vpop.f32.mrb[0].mxu0
        %962 = vmatprep.mubr.f32.mxu0 0.0
        %963 = vmatmul.mubr.f32.gmra.mrb[0].mxu0 %v755
        %v964 = vpop.f32.mrb[0].mxu0
        %v965 = vadd.f32 0.0, %v964
        %v966 = vpop.f32.mrb[0].mxu0
        %967 = vmatprep.mubr.f32.mxu0 0.0
        %968 = vmatmul.mubr.f32.gmra.mrb[0].mxu0 %v758
        %v969 = vpop.f32.mrb[0].mxu0
        %v970 = vadd.f32 0.0, %v969
        %v971 = vpop.f32.mrb[0].mxu0
        %972 = vmatprep.mubr.f32.mxu0 0.0
        %973 = vmatmul.mubr.f32.gmra.mrb[0].mxu0 %v761
        %v974 = vpop.f32.mrb[0].mxu0
        %v975 = vadd.f32 0.0, %v974
        %v976 = vpop.f32.mrb[0].mxu0
        %977 = vmatprep.mubr.f32.mxu0 0.0
        %978 = vmatmul.mubr.f32.gmra.mrb[0].mxu0 %v764
        %v979 = vpop.f32.mrb[0].mxu0
        %v980 = vadd.f32 0.0, %v979
        %v981 = vpop.f32.mrb[0].mxu0
        %982 = vmatprep.mubr.f32.mxu0 0.0
        %983 = vmatmul.mubr.f32.gmra.mrb[0].mxu0 %v767
        %v984 = vpop.f32.mrb[0].mxu0
        %v985 = vadd.f32 0.0, %v984
        %v986 = vpop.f32.mrb[0].mxu0
        %987 = vmatprep.mubr.f32.mxu0 0.0
        %988 = vmatmul.mubr.f32.gmra.mrb[0].mxu0 %v770
        %v989 = vpop.f32.mrb[0].mxu0
        %v990 = vadd.f32 0.0, %v989
        %v991 = vpop.f32.mrb[0].mxu0
        %992 = vmatprep.mubr.f32.mxu0 0.0
        %993 = vmatmul.mubr.f32.gmra.mrb[0].mxu0 %v773
        %v994 = vpop.f32.mrb[0].mxu0
        %v995 = vadd.f32 0.0, %v994
        %v996 = vpop.f32.mrb[0].mxu0
        %997 = vmatprep.mubr.f32.mxu0 0.0
        %998 = vmatmul.mubr.f32.gmra.mrb[0].mxu0 %v776
        %v999 = vpop.f32.mrb[0].mxu0
        %v1000 = vadd.f32 0.0, %v999
        %v1001 = vpop.f32.mrb[0].mxu0
        %1002 = vmatprep.mubr.f32.mxu0 0.0
        %1003 = vmatmul.mubr.f32.gmra.mrb[0].mxu0 %v779
        %v1004 = vpop.f32.mrb[0].mxu0
        %v1005 = vadd.f32 0.0, %v1004
        %v1006 = vpop.f32.mrb[0].mxu0
        %1007 = vmatprep.mubr.f32.mxu0 0.0
        %1008 = vmatmul.mubr.f32.gmra.mrb[0].mxu0 %v782
        %v1009 = vpop.f32.mrb[0].mxu0
        %v1010 = vadd.f32 0.0, %v1009
        %v1011 = vpop.f32.mrb[0].mxu0
        %1012 = vdwg.mxu0
        %v1013 = vmax.f32 %v561, %v593
        %v1014 = vmax.f32 %v564, %v596
        %v1015 = vmax.f32 %v569, %v601
        %v1016 = vmax.f32 %v572, %v604
        %v1017 = vmax.f32 %v577, %v609
        %v1018 = vmax.f32 %v580, %v612
        %v1019 = vmax.f32 %v585, %v617
        %v1020 = vmax.f32 %v588, %v620
        %v1021 = vmax.f32 %v625, %v657
        %v1022 = vmax.f32 %v628, %v660
        %v1023 = vmax.f32 %v633, %v665
        %v1024 = vmax.f32 %v636, %v668
        %v1025 = vmax.f32 %v641, %v673
        %v1026 = vmax.f32 %v644, %v676
        %v1027 = vmax.f32 %v649, %v681
        %v1028 = vmax.f32 %v652, %v684
        %v1029 = vmax.f32 %v1013, %v1021
        %v1030 = vmax.f32 %v1014, %v1022
        %v1031 = vmax.f32 %v1015, %v1023
        %v1032 = vmax.f32 %v1016, %v1024
        %v1033 = vmax.f32 %v1017, %v1025
        %v1034 = vmax.f32 %v1018, %v1026
        %v1035 = vmax.f32 %v1019, %v1027
        %v1036 = vmax.f32 %v1020, %v1028
        %v1037 = vld [vmem:[%s5] sm:$0x1]
        %v1039 = vlaneseq
        %v1040 = vshrl.u32 %v1039, 7
        %v1041 = vsub.s32 0, %v1040
        %v1042 = vrot.slane %v1037, %v1041
        %v1044 = vadd.f32 %v1029, %v1042
        %v1045 = vadd.f32 %v1030, %v1042
        %v1046 = vadd.f32 %v1031, %v1042
        %v1047 = vadd.f32 %v1032, %v1042
        %v1048 = vadd.f32 %v1033, %v1042
        %v1049 = vadd.f32 %v1034, %v1042
        %v1050 = vadd.f32 %v1035, %v1042
        %v1051 = vadd.f32 %v1036, %v1042
        %v1052 = vpack.c.bf16 %v1045, %v1044
        %v1053 = vpack.c.bf16 %v1047, %v1046
        %v1054 = vpack.c.bf16 %v1049, %v1048
        %v1055 = vpack.c.bf16 %v1051, %v1050
        %vm1056 = vcmask 15360
        %1057 = vst.msk [vmem:[#allocation2] sm:$0xff] %vm1056, %v1052
        %1058 = vst.msk [vmem:[#allocation2 + $0x8] sm:$0xff] %vm1056, %v1053
        %1059 = vst.msk [vmem:[#allocation2 + $0x10] sm:$0xff] %vm1056, %v1054
        %1060 = vst.msk [vmem:[#allocation2 + $0x18] sm:$0xff] %vm1056, %v1055
        %v1061 = vmax.f32 %v855, %v895
        %v1062 = vmax.f32 %v860, %v900
        %v1063 = vmax.f32 %v865, %v905
        %v1064 = vmax.f32 %v870, %v910
        %v1065 = vmax.f32 %v875, %v915
        %v1066 = vmax.f32 %v880, %v920
        %v1067 = vmax.f32 %v885, %v925
        %v1068 = vmax.f32 %v890, %v930
        %v1069 = vmax.f32 %v935, %v975
        %v1070 = vmax.f32 %v940, %v980
        %v1071 = vmax.f32 %v945, %v985
        %v1072 = vmax.f32 %v950, %v990
        %v1073 = vmax.f32 %v955, %v995
        %v1074 = vmax.f32 %v960, %v1000
        %v1075 = vmax.f32 %v965, %v1005
        %v1076 = vmax.f32 %v970, %v1010
        %v1077 = vmax.f32 %v1061, %v1069
        %v1078 = vmax.f32 %v1062, %v1070
        %v1079 = vmax.f32 %v1063, %v1071
        %v1080 = vmax.f32 %v1064, %v1072
        %v1081 = vmax.f32 %v1065, %v1073
        %v1082 = vmax.f32 %v1066, %v1074
        %v1083 = vmax.f32 %v1067, %v1075
        %v1084 = vmax.f32 %v1068, %v1076
        %v1085 = vld [vmem:[%s7] sm:$0x1]
        %v1087 = vlaneseq
        %v1088 = vshrl.u32 %v1087, 7
        %v1089 = vsub.s32 0, %v1088
        %v1090 = vrot.slane %v1085, %v1089
        %v1092 = vadd.f32 %v1077, %v1090
        %v1093 = vadd.f32 %v1078, %v1090
        %v1094 = vadd.f32 %v1079, %v1090
        %v1095 = vadd.f32 %v1080, %v1090
        %v1096 = vadd.f32 %v1081, %v1090
        %v1097 = vadd.f32 %v1082, %v1090
        %v1098 = vadd.f32 %v1083, %v1090
        %v1099 = vadd.f32 %v1084, %v1090
        %1100 = vst.msk [vmem:[#allocation3] sm:$0xff] %vm1056, %v1092
        %1101 = vst.msk [vmem:[#allocation3 + $0x8] sm:$0xff] %vm1056, %v1093
        %1102 = vst.msk [vmem:[#allocation3 + $0x10] sm:$0xff] %vm1056, %v1094
        %1103 = vst.msk [vmem:[#allocation3 + $0x18] sm:$0xff] %vm1056, %v1095
        %1104 = vst.msk [vmem:[#allocation3 + $0x20] sm:$0xff] %vm1056, %v1096
        %1105 = vst.msk [vmem:[#allocation3 + $0x28] sm:$0xff] %vm1056, %v1097
        %1106 = vst.msk [vmem:[#allocation3 + $0x30] sm:$0xff] %vm1056, %v1098
        %1107 = vst.msk [vmem:[#allocation3 + $0x38] sm:$0xff] %vm1056, %v1099
      $region64: #{tpu_custom_call.1} parent=59 // pred_fallthru
        _
      %v1108 = vld [vmem:[%s402] sm:$0xff]
      %v1109 = vld [vmem:[%s402 + $0x8] sm:$0xff]
      %v1110 = vld [vmem:[%s402 + $0x10] sm:$0xff]
      %v1111 = vld [vmem:[%s402 + $0x18] sm:$0xff]
      %v1112 = vld [vmem:[%s402 + $0x20] sm:$0xff]
      %v1113 = vld [vmem:[%s402 + $0x28] sm:$0xff]
      %v1114 = vld [vmem:[%s402 + $0x30] sm:$0xff]
      %v1115 = vld [vmem:[%s402 + $0x38] sm:$0xff]
      %v1116 = vld [vmem:[%s402 + $0x40] sm:$0xff]
      %v1117 = vld [vmem:[%s402 + $0x48] sm:$0xff]
      %v1118 = vld [vmem:[%s402 + $0x50] sm:$0xff]
      %v1119 = vld [vmem:[%s402 + $0x58] sm:$0xff]
      %v1120 = vld [vmem:[%s402 + $0x60] sm:$0xff]
      %v1121 = vld [vmem:[%s402 + $0x68] sm:$0xff]
      %v1122 = vld [vmem:[%s402 + $0x70] sm:$0xff]
      %v1123 = vld [vmem:[%s402 + $0x78] sm:$0xff]
      %v1124 = vld [vmem:[%s2] sm:$0xf]
      %v1125 = vld [vmem:[%s3] sm:$0x1]
      %v1127 = vlaneseq
      %v1128 = vshrl.u32 %v1127, 7
      %v1129 = vsub.s32 0, %v1128
      %v1130 = vrot.slane %v1125, %v1129
      %vm1132 = vcmask 31744
      %v1134 = vsel %vm1132, %v1108, 0
      %v1137 = vsel %vm1132, %v1109, 0
      %v1140 = vsel %vm1132, %v1110, 0
      %v1143 = vsel %vm1132, %v1111, 0
      %v1146 = vsel %vm1132, %v1112, 0
      %v1149 = vsel %vm1132, %v1113, 0
      %v1152 = vsel %vm1132, %v1114, 0
      %v1155 = vsel %vm1132, %v1115, 0
      %v1158 = vsel %vm1132, %v1116, 0
      %v1161 = vsel %vm1132, %v1117, 0
      %v1164 = vsel %vm1132, %v1118, 0
      %v1167 = vsel %vm1132, %v1119, 0
      %v1170 = vsel %vm1132, %v1120, 0
      %v1173 = vsel %vm1132, %v1121, 0
      %v1176 = vsel %vm1132, %v1122, 0
      %v1179 = vsel %vm1132, %v1123, 0
      %vm1181 = vcmask 1043456
      %v1183 = vsel %vm1181, %v1124, 0
      %1185 = vmatprep.subr.mxu0 0.0
      %1186 = vmatpush1.msra.mxu0 %v1183
      %1187 = vmatprep.subr.mxu0 0.0
      %1188 = vmatpush1.msra.mxu0 0.0
      %1189 = vmatprep.subr.mxu0 0.0
      %1190 = vmatpush1.msra.mxu0 0.0
      %1191 = vmatprep.subr.mxu0 0.0
      %1192 = vmatpush1.msra.mxu0 0.0
      %1193 = vmatprep.subr.mxu0 0.0
      %1194 = vmatpush1.msra.mxu0 0.0
      %1195 = vmatprep.subr.mxu0 0.0
      %1196 = vmatpush1.msra.mxu0 0.0
      %1197 = vmatprep.subr.mxu0 0.0
      %1198 = vmatpush1.msra.mxu0 0.0
      %1199 = vmatprep.subr.mxu0 0.0
      %1200 = vmatpush1.msra.mxu0 0.0
      %1201 = vmatprep.subr.mxu0 0.0
      %1202 = vmatpush1.msra.mxu0 0.0
      %1203 = vmatprep.subr.mxu0 0.0
      %1204 = vmatpush1.msra.mxu0 0.0
      %1205 = vmatprep.subr.mxu0 0.0
      %1206 = vmatpush1.msra.mxu0 0.0
      %1207 = vmatprep.subr.mxu0 0.0
      %1208 = vmatpush1.msra.mxu0 0.0
      %1209 = vmatprep.subr.mxu0 0.0
      %1210 = vmatpush1.msra.mxu0 0.0
      %1211 = vmatprep.subr.mxu0 0.0
      %1212 = vmatpush1.msra.mxu0 0.0
      %1213 = vmatprep.subr.mxu0 0.0
      %1214 = vmatpush1.msra.mxu0 0.0
      %1215 = vmatprep.subr.mxu0 0.0
      %1216 = vmatpush1.msra.mxu0 0.0
      %1217 = vmatprep.subr.mxu0 0.0
      %1218 = vmatpush1.msra.mxu0 0.0
      %1219 = vmatprep.subr.mxu0 0.0
      %1220 = vmatpush1.msra.mxu0 0.0
      %1221 = vmatprep.subr.mxu0 0.0
      %1222 = vmatpush1.msra.mxu0 0.0
      %1223 = vmatprep.subr.mxu0 0.0
      %1224 = vmatpush1.msra.mxu0 0.0
      %1225 = vmatprep.subr.mxu0 0.0
      %1226 = vmatpush1.msra.mxu0 0.0
      %1227 = vmatprep.subr.mxu0 0.0
      %1228 = vmatpush1.msra.mxu0 0.0
      %1229 = vmatprep.subr.mxu0 0.0
      %1230 = vmatpush1.msra.mxu0 0.0
      %1231 = vmatprep.subr.mxu0 0.0
      %1232 = vmatpush1.msra.mxu0 0.0
      %1233 = vmatprep.subr.mxu0 0.0
      %1234 = vmatpush1.msra.mxu0 0.0
      %1235 = vmatprep.subr.mxu0 0.0
      %1236 = vmatpush1.msra.mxu0 0.0
      %1237 = vmatprep.subr.mxu0 0.0
      %1238 = vmatpush1.msra.mxu0 0.0
      %1239 = vmatprep.subr.mxu0 0.0
      %1240 = vmatpush1.msra.mxu0 0.0
      %1241 = vmatprep.subr.mxu0 0.0
      %1242 = vmatpush1.msra.mxu0 0.0
      %1243 = vmatprep.subr.mxu0 0.0
      %1244 = vmatpush1.msra.mxu0 0.0
      %1245 = vmatprep.subr.mxu0 0.0
      %1246 = vmatpush1.msra.mxu0 0.0
      %1247 = vmatprep.subr.mxu0 0.0
      %1248 = vmatpush1.msra.mxu0 0.0
      %1249 = vmatprep.mubr.f32.mxu0 0.0
      %1250 = vmatmul.mubr.f32.gmra.mrb[0].mxu0 %v1134
      %v1251 = vpop.f32.mrb[0].mxu0
      %v1252 = vadd.f32 %v1130, %v1251
      %v1253 = vpop.f32.mrb[0].mxu0
      %1254 = vmatprep.mubr.f32.mxu0 0.0
      %1255 = vmatmul.mubr.f32.gmra.mrb[0].mxu0 %v1137
      %v1256 = vpop.f32.mrb[0].mxu0
      %v1257 = vadd.f32 %v1130, %v1256
      %v1258 = vpop.f32.mrb[0].mxu0
      %1259 = vmatprep.mubr.f32.mxu0 0.0
      %1260 = vmatmul.mubr.f32.gmra.mrb[0].mxu0 %v1140
      %v1261 = vpop.f32.mrb[0].mxu0
      %v1262 = vadd.f32 %v1130, %v1261
      %v1263 = vpop.f32.mrb[0].mxu0
      %1264 = vmatprep.mubr.f32.mxu0 0.0
      %1265 = vmatmul.mubr.f32.gmra.mrb[0].mxu0 %v1143
      %v1266 = vpop.f32.mrb[0].mxu0
      %v1267 = vadd.f32 %v1130, %v1266
      %v1268 = vpop.f32.mrb[0].mxu0
      %1269 = vmatprep.mubr.f32.mxu0 0.0
      %1270 = vmatmul.mubr.f32.gmra.mrb[0].mxu0 %v1146
      %v1271 = vpop.f32.mrb[0].mxu0
      %v1272 = vadd.f32 %v1130, %v1271
      %v1273 = vpop.f32.mrb[0].mxu0
      %1274 = vmatprep.mubr.f32.mxu0 0.0
      %1275 = vmatmul.mubr.f32.gmra.mrb[0].mxu0 %v1149
      %v1276 = vpop.f32.mrb[0].mxu0
      %v1277 = vadd.f32 %v1130, %v1276
      %v1278 = vpop.f32.mrb[0].mxu0
      %1279 = vmatprep.mubr.f32.mxu0 0.0
      %1280 = vmatmul.mubr.f32.gmra.mrb[0].mxu0 %v1152
      %v1281 = vpop.f32.mrb[0].mxu0
      %v1282 = vadd.f32 %v1130, %v1281
      %v1283 = vpop.f32.mrb[0].mxu0
      %1284 = vmatprep.mubr.f32.mxu0 0.0
      %1285 = vmatmul.mubr.f32.gmra.mrb[0].mxu0 %v1155
      %v1286 = vpop.f32.mrb[0].mxu0
      %v1287 = vadd.f32 %v1130, %v1286
      %v1288 = vpop.f32.mrb[0].mxu0
      %1289 = vmatprep.mubr.f32.mxu0 0.0
      %1290 = vmatmul.mubr.f32.gmra.mrb[0].mxu0 %v1158
      %v1291 = vpop.f32.mrb[0].mxu0
      %v1292 = vadd.f32 %v1130, %v1291
      %v1293 = vpop.f32.mrb[0].mxu0
      %1294 = vmatprep.mubr.f32.mxu0 0.0
      %1295 = vmatmul.mubr.f32.gmra.mrb[0].mxu0 %v1161
      %v1296 = vpop.f32.mrb[0].mxu0
      %v1297 = vadd.f32 %v1130, %v1296
      %v1298 = vpop.f32.mrb[0].mxu0
      %1299 = vmatprep.mubr.f32.mxu0 0.0
      %1300 = vmatmul.mubr.f32.gmra.mrb[0].mxu0 %v1164
      %v1301 = vpop.f32.mrb[0].mxu0
      %v1302 = vadd.f32 %v1130, %v1301
      %v1303 = vpop.f32.mrb[0].mxu0
      %1304 = vmatprep.mubr.f32.mxu0 0.0
      %1305 = vmatmul.mubr.f32.gmra.mrb[0].mxu0 %v1167
      %v1306 = vpop.f32.mrb[0].mxu0
      %v1307 = vadd.f32 %v1130, %v1306
      %v1308 = vpop.f32.mrb[0].mxu0
      %1309 = vmatprep.mubr.f32.mxu0 0.0
      %1310 = vmatmul.mubr.f32.gmra.mrb[0].mxu0 %v1170
      %v1311 = vpop.f32.mrb[0].mxu0
      %v1312 = vadd.f32 %v1130, %v1311
      %v1313 = vpop.f32.mrb[0].mxu0
      %1314 = vmatprep.mubr.f32.mxu0 0.0
      %1315 = vmatmul.mubr.f32.gmra.mrb[0].mxu0 %v1173
      %v1316 = vpop.f32.mrb[0].mxu0
      %v1317 = vadd.f32 %v1130, %v1316
      %v1318 = vpop.f32.mrb[0].mxu0
      %1319 = vmatprep.mubr.f32.mxu0 0.0
      %1320 = vmatmul.mubr.f32.gmra.mrb[0].mxu0 %v1176
      %v1321 = vpop.f32.mrb[0].mxu0
      %v1322 = vadd.f32 %v1130, %v1321
      %v1323 = vpop.f32.mrb[0].mxu0
      %1324 = vmatprep.mubr.f32.mxu0 0.0
      %1325 = vmatmul.mubr.f32.gmra.mrb[0].mxu0 %v1179
      %v1326 = vpop.f32.mrb[0].mxu0
      %v1327 = vadd.f32 %v1130, %v1326
      %v1328 = vpop.f32.mrb[0].mxu0
      %1329 = vdwg.mxu0
      %v1330 = vld [vmem:[#allocation3] sm:$0xff]
      %v1331 = vld [vmem:[#allocation3 + $0x8] sm:$0xff]
      %v1332 = vld [vmem:[#allocation3 + $0x10] sm:$0xff]
      %v1333 = vld [vmem:[#allocation3 + $0x18] sm:$0xff]
      %v1334 = vld [vmem:[#allocation3 + $0x20] sm:$0xff]
      %v1335 = vld [vmem:[#allocation3 + $0x28] sm:$0xff]
      %v1336 = vld [vmem:[#allocation3 + $0x30] sm:$0xff]
      %v1337 = vld [vmem:[#allocation3 + $0x38] sm:$0xff]
      %vm1338 = vcmask 15360
      %v1340 = vsel %vm1338, %v1252, 0
      %v1343 = vsel %vm1338, %v1257, 0
      %v1346 = vsel %vm1338, %v1262, 0
      %v1349 = vsel %vm1338, %v1267, 0
      %v1352 = vsel %vm1338, %v1272, 0
      %v1355 = vsel %vm1338, %v1277, 0
      %v1358 = vsel %vm1338, %v1282, 0
      %v1361 = vsel %vm1338, %v1287, 0
      %v1364 = vsel %vm1338, %v1292, 0
      %v1367 = vsel %vm1338, %v1297, 0
      %v1370 = vsel %vm1338, %v1302, 0
      %v1373 = vsel %vm1338, %v1307, 0
      %v1376 = vsel %vm1338, %v1312, 0
      %v1379 = vsel %vm1338, %v1317, 0
      %v1382 = vsel %vm1338, %v1322, 0
      %v1385 = vsel %vm1338, %v1327, 0
      %v1388 = vsel %vm1338, %v1330, 0
      %v1391 = vsel %vm1338, %v1331, 0
      %v1394 = vsel %vm1338, %v1332, 0
      %v1397 = vsel %vm1338, %v1333, 0
      %v1400 = vsel %vm1338, %v1334, 0
      %v1403 = vsel %vm1338, %v1335, 0
      %v1406 = vsel %vm1338, %v1336, 0
      %v1409 = vsel %vm1338, %v1337, 0
      %1411 = vmatprep.subr.mxu0 0.0
      %1412 = vmatpush1.xpose.msra.mxu0 %v1388
      %1413 = vmatprep.subr.mxu0 0.0
      %1414 = vmatpush1.xpose.msra.mxu0 %v1391
      %1415 = vmatprep.subr.mxu0 0.0
      %1416 = vmatpush1.xpose.msra.mxu0 %v1394
      %1417 = vmatprep.subr.mxu0 0.0
      %1418 = vmatpush1.xpose.msra.mxu0 %v1397
      %1419 = vmatprep.subr.mxu0 0.0
      %1420 = vmatpush1.xpose.msra.mxu0 %v1400
      %1421 = vmatprep.subr.mxu0 0.0
      %1422 = vmatpush1.xpose.msra.mxu0 %v1403
      %1423 = vmatprep.subr.mxu0 0.0
      %1424 = vmatpush1.xpose.msra.mxu0 %v1406
      %1425 = vmatprep.subr.mxu0 0.0
      %1426 = vmatpush1.xpose.msra.mxu0 %v1409
      %1427 = vmatprep.subr.mxu0 0.0
      %1428 = vmatpush1.xpose.msra.mxu0 0.0
      %1429 = vmatprep.subr.mxu0 0.0
      %1430 = vmatpush1.xpose.msra.mxu0 0.0
      %1431 = vmatprep.subr.mxu0 0.0
      %1432 = vmatpush1.xpose.msra.mxu0 0.0
      %1433 = vmatprep.subr.mxu0 0.0
      %1434 = vmatpush1.xpose.msra.mxu0 0.0
      %1435 = vmatprep.subr.mxu0 0.0
      %1436 = vmatpush1.xpose.msra.mxu0 0.0
      %1437 = vmatprep.subr.mxu0 0.0
      %1438 = vmatpush1.xpose.msra.mxu0 0.0
      %1439 = vmatprep.subr.mxu0 0.0
      %1440 = vmatpush1.xpose.msra.mxu0 0.0
      %1441 = vmatprep.subr.mxu0 0.0
      %1442 = vmatpush1.xpose.msra.mxu0 0.0
      %1443 = vmatprep.subr.mxu0 0.0
      %1444 = vmatpush1.xpose.msra.mxu0 0.0
      %1445 = vmatprep.subr.mxu0 0.0
      %1446 = vmatpush1.xpose.msra.mxu0 0.0
      %1447 = vmatprep.subr.mxu0 0.0
      %1448 = vmatpush1.xpose.msra.mxu0 0.0
      %1449 = vmatprep.subr.mxu0 0.0
      %1450 = vmatpush1.xpose.msra.mxu0 0.0
      %1451 = vmatprep.subr.mxu0 0.0
      %1452 = vmatpush1.xpose.msra.mxu0 0.0
      %1453 = vmatprep.subr.mxu0 0.0
      %1454 = vmatpush1.xpose.msra.mxu0 0.0
      %1455 = vmatprep.subr.mxu0 0.0
      %1456 = vmatpush1.xpose.msra.mxu0 0.0
      %1457 = vmatprep.subr.mxu0 0.0
      %1458 = vmatpush1.xpose.msra.mxu0 0.0
      %1459 = vmatprep.subr.mxu0 0.0
      %1460 = vmatpush1.xpose.msra.mxu0 0.0
      %1461 = vmatprep.subr.mxu0 0.0
      %1462 = vmatpush1.xpose.msra.mxu0 0.0
      %1463 = vmatprep.subr.mxu0 0.0
      %1464 = vmatpush1.xpose.msra.mxu0 0.0
      %1465 = vmatprep.subr.mxu0 0.0
      %1466 = vmatpush1.xpose.msra.mxu0 0.0
      %1467 = vmatprep.subr.mxu0 0.0
      %1468 = vmatpush1.xpose.msra.mxu0 0.0
      %1469 = vmatprep.subr.mxu0 0.0
      %1470 = vmatpush1.xpose.msra.mxu0 0.0
      %1471 = vmatprep.subr.mxu0 0.0
      %1472 = vmatpush1.xpose.msra.mxu0 0.0
      %1473 = vmatprep.subr.mxu0 0.0
      %1474 = vmatpush1.xpose.msra.mxu0 0.0
      %1475 = vmatprep.mubr.f32.mxu0 0.0
      %1476 = vmatmul.mubr.f32.gmra.mrb[0].mxu0 %v1340
      %v1477 = vpop.f32.mrb[0].mxu0
      %v1478 = vadd.f32 0.0, %v1477
      %v1479 = vpop.f32.mrb[0].mxu0
      %1480 = vmatprep.mubr.f32.mxu0 0.0
      %1481 = vmatmul.mubr.f32.gmra.mrb[0].mxu0 %v1343
      %v1482 = vpop.f32.mrb[0].mxu0
      %v1483 = vadd.f32 0.0, %v1482
      %v1484 = vpop.f32.mrb[0].mxu0
      %1485 = vmatprep.mubr.f32.mxu0 0.0
      %1486 = vmatmul.mubr.f32.gmra.mrb[0].mxu0 %v1346
      %v1487 = vpop.f32.mrb[0].mxu0
      %v1488 = vadd.f32 0.0, %v1487
      %v1489 = vpop.f32.mrb[0].mxu0
      %1490 = vmatprep.mubr.f32.mxu0 0.0
      %1491 = vmatmul.mubr.f32.gmra.mrb[0].mxu0 %v1349
      %v1492 = vpop.f32.mrb[0].mxu0
      %v1493 = vadd.f32 0.0, %v1492
      %v1494 = vpop.f32.mrb[0].mxu0
      %1495 = vmatprep.mubr.f32.mxu0 0.0
      %1496 = vmatmul.mubr.f32.gmra.mrb[0].mxu0 %v1352
      %v1497 = vpop.f32.mrb[0].mxu0
      %v1498 = vadd.f32 0.0, %v1497
      %v1499 = vpop.f32.mrb[0].mxu0
      %1500 = vmatprep.mubr.f32.mxu0 0.0
      %1501 = vmatmul.mubr.f32.gmra.mrb[0].mxu0 %v1355
      %v1502 = vpop.f32.mrb[0].mxu0
      %v1503 = vadd.f32 0.0, %v1502
      %v1504 = vpop.f32.mrb[0].mxu0
      %1505 = vmatprep.mubr.f32.mxu0 0.0
      %1506 = vmatmul.mubr.f32.gmra.mrb[0].mxu0 %v1358
      %v1507 = vpop.f32.mrb[0].mxu0
      %v1508 = vadd.f32 0.0, %v1507
      %v1509 = vpop.f32.mrb[0].mxu0
      %1510 = vmatprep.mubr.f32.mxu0 0.0
      %1511 = vmatmul.mubr.f32.gmra.mrb[0].mxu0 %v1361
      %v1512 = vpop.f32.mrb[0].mxu0
      %v1513 = vadd.f32 0.0, %v1512
      %v1514 = vpop.f32.mrb[0].mxu0
      %1515 = vmatprep.mubr.f32.mxu0 0.0
      %1516 = vmatmul.mubr.f32.gmra.mrb[0].mxu0 %v1364
      %v1517 = vpop.f32.mrb[0].mxu0
      %v1518 = vadd.f32 0.0, %v1517
      %v1519 = vpop.f32.mrb[0].mxu0
      %1520 = vmatprep.mubr.f32.mxu0 0.0
      %1521 = vmatmul.mubr.f32.gmra.mrb[0].mxu0 %v1367
      %v1522 = vpop.f32.mrb[0].mxu0
      %v1523 = vadd.f32 0.0, %v1522
      %v1524 = vpop.f32.mrb[0].mxu0
      %1525 = vmatprep.mubr.f32.mxu0 0.0
      %1526 = vmatmul.mubr.f32.gmra.mrb[0].mxu0 %v1370
      %v1527 = vpop.f32.mrb[0].mxu0
      %v1528 = vadd.f32 0.0, %v1527
      %v1529 = vpop.f32.mrb[0].mxu0
      %1530 = vmatprep.mubr.f32.mxu0 0.0
      %1531 = vmatmul.mubr.f32.gmra.mrb[0].mxu0 %v1373
      %v1532 = vpop.f32.mrb[0].mxu0
      %v1533 = vadd.f32 0.0, %v1532
      %v1534 = vpop.f32.mrb[0].mxu0
      %1535 = vmatprep.mubr.f32.mxu0 0.0
      %1536 = vmatmul.mubr.f32.gmra.mrb[0].mxu0 %v1376
      %v1537 = vpop.f32.mrb[0].mxu0
      %v1538 = vadd.f32 0.0, %v1537
      %v1539 = vpop.f32.mrb[0].mxu0
      %1540 = vmatprep.mubr.f32.mxu0 0.0
      %1541 = vmatmul.mubr.f32.gmra.mrb[0].mxu0 %v1379
      %v1542 = vpop.f32.mrb[0].mxu0
      %v1543 = vadd.f32 0.0, %v1542
      %v1544 = vpop.f32.mrb[0].mxu0
      %1545 = vmatprep.mubr.f32.mxu0 0.0
      %1546 = vmatmul.mubr.f32.gmra.mrb[0].mxu0 %v1382
      %v1547 = vpop.f32.mrb[0].mxu0
      %v1548 = vadd.f32 0.0, %v1547
      %v1549 = vpop.f32.mrb[0].mxu0
      %1550 = vmatprep.mubr.f32.mxu0 0.0
      %1551 = vmatmul.mubr.f32.gmra.mrb[0].mxu0 %v1385
      %v1552 = vpop.f32.mrb[0].mxu0
      %v1553 = vadd.f32 0.0, %v1552
      %v1554 = vpop.f32.mrb[0].mxu0
      %1555 = vdwg.mxu0
      %vm1556 = vcmask 523264
      %v1557 = vsel %vm1556, %v1478, -inf
      %1558 = vmax.xlane.f32.xlu0 %v1557
      %v1559 = vpop.xlane.xlu0 %1558
      %v1560 = vsel %vm1556, %v1483, -inf
      %1561 = vmax.xlane.f32.xlu0 %v1560
      %v1562 = vpop.xlane.xlu0 %1561
      %v1563 = vsel %vm1556, %v1488, -inf
      %1564 = vmax.xlane.f32.xlu0 %v1563
      %v1565 = vpop.xlane.xlu0 %1564
      %v1566 = vsel %vm1556, %v1493, -inf
      %1567 = vmax.xlane.f32.xlu0 %v1566
      %v1568 = vpop.xlane.xlu0 %1567
      %v1569 = vsel %vm1556, %v1498, -inf
      %1570 = vmax.xlane.f32.xlu0 %v1569
      %v1571 = vpop.xlane.xlu0 %1570
      %v1572 = vsel %vm1556, %v1503, -inf
      %1573 = vmax.xlane.f32.xlu0 %v1572
      %v1574 = vpop.xlane.xlu0 %1573
      %v1575 = vsel %vm1556, %v1508, -inf
      %1576 = vmax.xlane.f32.xlu0 %v1575
      %v1577 = vpop.xlane.xlu0 %1576
      %v1578 = vsel %vm1556, %v1513, -inf
      %1579 = vmax.xlane.f32.xlu0 %v1578
      %v1580 = vpop.xlane.xlu0 %1579
      %v1581 = vsel %vm1556, %v1518, -inf
      %1582 = vmax.xlane.f32.xlu0 %v1581
      %v1583 = vpop.xlane.xlu0 %1582
      %v1584 = vsel %vm1556, %v1523, -inf
      %1585 = vmax.xlane.f32.xlu0 %v1584
      %v1586 = vpop.xlane.xlu0 %1585
      %v1587 = vsel %vm1556, %v1528, -inf
      %1588 = vmax.xlane.f32.xlu0 %v1587
      %v1589 = vpop.xlane.xlu0 %1588
      %v1590 = vsel %vm1556, %v1533, -inf
      %1591 = vmax.xlane.f32.xlu0 %v1590
      %v1592 = vpop.xlane.xlu0 %1591
      %v1593 = vsel %vm1556, %v1538, -inf
      %1594 = vmax.xlane.f32.xlu0 %v1593
      %v1595 = vpop.xlane.xlu0 %1594
      %v1596 = vsel %vm1556, %v1543, -inf
      %1597 = vmax.xlane.f32.xlu0 %v1596
      %v1598 = vpop.xlane.xlu0 %1597
      %v1599 = vsel %vm1556, %v1548, -inf
      %1600 = vmax.xlane.f32.xlu0 %v1599
      %v1601 = vpop.xlane.xlu0 %1600
      %v1602 = vsel %vm1556, %v1553, -inf
      %1603 = vmax.xlane.f32.xlu0 %v1602
      %v1604 = vpop.xlane.xlu0 %1603
      %v1605 = vsub.f32 %v1478, %v1559
      %v1606 = vsub.f32 %v1483, %v1562
      %v1607 = vsub.f32 %v1488, %v1565
      %v1608 = vsub.f32 %v1493, %v1568
      %v1609 = vsub.f32 %v1498, %v1571
      %v1610 = vsub.f32 %v1503, %v1574
      %v1611 = vsub.f32 %v1508, %v1577
      %v1612 = vsub.f32 %v1513, %v1580
      %v1613 = vsub.f32 %v1518, %v1583
      %v1614 = vsub.f32 %v1523, %v1586
      %v1615 = vsub.f32 %v1528, %v1589
      %v1616 = vsub.f32 %v1533, %v1592
      %v1617 = vsub.f32 %v1538, %v1595
      %v1618 = vsub.f32 %v1543, %v1598
      %v1619 = vsub.f32 %v1548, %v1601
      %v1620 = vsub.f32 %v1553, %v1604
      %v1621 = vmul.f32 %v1605, 1.442695
      %v1622 = vpow.pop %v1621
      %v1623 = vmul.f32 %v1606, 1.442695
      %v1624 = vpow.pop %v1623
      %v1625 = vmul.f32 %v1607, 1.442695
      %v1626 = vpow.pop %v1625
      %v1627 = vmul.f32 %v1608, 1.442695
      %v1628 = vpow.pop %v1627
      %v1629 = vmul.f32 %v1609, 1.442695
      %v1630 = vpow.pop %v1629
      %v1631 = vmul.f32 %v1610, 1.442695
      %v1632 = vpow.pop %v1631
      %v1633 = vmul.f32 %v1611, 1.442695
      %v1634 = vpow.pop %v1633
      %v1635 = vmul.f32 %v1612, 1.442695
      %v1636 = vpow.pop %v1635
      %v1637 = vmul.f32 %v1613, 1.442695
      %v1638 = vpow.pop %v1637
      %v1639 = vmul.f32 %v1614, 1.442695
      %v1640 = vpow.pop %v1639
      %v1641 = vmul.f32 %v1615, 1.442695
      %v1642 = vpow.pop %v1641
      %v1643 = vmul.f32 %v1616, 1.442695
      %v1644 = vpow.pop %v1643
      %v1645 = vmul.f32 %v1617, 1.442695
      %v1646 = vpow.pop %v1645
      %v1647 = vmul.f32 %v1618, 1.442695
      %v1648 = vpow.pop %v1647
      %v1649 = vmul.f32 %v1619, 1.442695
      %v1650 = vpow.pop %v1649
      %v1651 = vmul.f32 %v1620, 1.442695
      %v1652 = vpow.pop %v1651
      %v1653 = vsel %vm1556, %v1622, 0.0
      %1654 = vadd.xlane.f32.xlu0 %v1653
      %v1655 = vpop.xlane.xlu0 %1654
      %v1656 = vsel %vm1556, %v1624, 0.0
      %1657 = vadd.xlane.f32.xlu0 %v1656
      %v1658 = vpop.xlane.xlu0 %1657
      %v1659 = vsel %vm1556, %v1626, 0.0
      %1660 = vadd.xlane.f32.xlu0 %v1659
      %v1661 = vpop.xlane.xlu0 %1660
      %v1662 = vsel %vm1556, %v1628, 0.0
      %1663 = vadd.xlane.f32.xlu0 %v1662
      %v1664 = vpop.xlane.xlu0 %1663
      %v1665 = vsel %vm1556, %v1630, 0.0
      %1666 = vadd.xlane.f32.xlu0 %v1665
      %v1667 = vpop.xlane.xlu0 %1666
      %v1668 = vsel %vm1556, %v1632, 0.0
      %1669 = vadd.xlane.f32.xlu0 %v1668
      %v1670 = vpop.xlane.xlu0 %1669
      %v1671 = vsel %vm1556, %v1634, 0.0
      %1672 = vadd.xlane.f32.xlu0 %v1671
      %v1673 = vpop.xlane.xlu0 %1672
      %v1674 = vsel %vm1556, %v1636, 0.0
      %1675 = vadd.xlane.f32.xlu0 %v1674
      %v1676 = vpop.xlane.xlu0 %1675
      %v1677 = vsel %vm1556, %v1638, 0.0
      %1678 = vadd.xlane.f32.xlu0 %v1677
      %v1679 = vpop.xlane.xlu0 %1678
      %v1680 = vsel %vm1556, %v1640, 0.0
      %1681 = vadd.xlane.f32.xlu0 %v1680
      %v1682 = vpop.xlane.xlu0 %1681
      %v1683 = vsel %vm1556, %v1642, 0.0
      %1684 = vadd.xlane.f32.xlu0 %v1683
      %v1685 = vpop.xlane.xlu0 %1684
      %v1686 = vsel %vm1556, %v1644, 0.0
      %1687 = vadd.xlane.f32.xlu0 %v1686
      %v1688 = vpop.xlane.xlu0 %1687
      %v1689 = vsel %vm1556, %v1646, 0.0
      %1690 = vadd.xlane.f32.xlu0 %v1689
      %v1691 = vpop.xlane.xlu0 %1690
      %v1692 = vsel %vm1556, %v1648, 0.0
      %1693 = vadd.xlane.f32.xlu0 %v1692
      %v1694 = vpop.xlane.xlu0 %1693
      %v1695 = vsel %vm1556, %v1650, 0.0
      %1696 = vadd.xlane.f32.xlu0 %v1695
      %v1697 = vpop.xlane.xlu0 %1696
      %v1698 = vsel %vm1556, %v1652, 0.0
      %1699 = vadd.xlane.f32.xlu0 %v1698
      %v1700 = vpop.xlane.xlu0 %1699
      %v1701 = vpack.c.bf16 %v1624, %v1622
      %v1702 = vpack.c.bf16 %v1628, %v1626
      %v1703 = vpack.c.bf16 %v1632, %v1630
      %v1704 = vpack.c.bf16 %v1636, %v1634
      %v1705 = vpack.c.bf16 %v1640, %v1638
      %v1706 = vpack.c.bf16 %v1644, %v1642
      %v1707 = vpack.c.bf16 %v1648, %v1646
      %v1708 = vpack.c.bf16 %v1652, %v1650
      %v1709 = vld [vmem:[#allocation2] sm:$0xff]
      %v1710 = vld [vmem:[#allocation2 + $0x8] sm:$0xff]
      %v1711 = vld [vmem:[#allocation2 + $0x10] sm:$0xff]
      %v1712 = vld [vmem:[#allocation2 + $0x18] sm:$0xff]
      %v1714 = vsel %vm1556, %v1701, 0
      %v1717 = vsel %vm1556, %v1702, 0
      %v1720 = vsel %vm1556, %v1703, 0
      %v1723 = vsel %vm1556, %v1704, 0
      %v1726 = vsel %vm1556, %v1705, 0
      %v1729 = vsel %vm1556, %v1706, 0
      %v1732 = vsel %vm1556, %v1707, 0
      %v1735 = vsel %vm1556, %v1708, 0
      %1737 = vmatprep.subr.bf16.mxu0 0
      %1738 = vmatpush1.bf16.msra.mxu0 %v1709
      %1739 = vmatprep.subr.bf16.mxu0 0
      %1740 = vmatpush1.bf16.msra.mxu0 %v1710
      %1741 = vmatprep.subr.bf16.mxu0 0
      %1742 = vmatpush1.bf16.msra.mxu0 %v1711
      %1743 = vmatprep.subr.bf16.mxu0 0
      %1744 = vmatpush1.bf16.msra.mxu0 %v1712
      %1745 = vmatprep.subr.bf16.mxu0 0
      %1746 = vmatpush1.bf16.msra.mxu0 0
      %1747 = vmatprep.subr.bf16.mxu0 0
      %1748 = vmatpush1.bf16.msra.mxu0 0
      %1749 = vmatprep.subr.bf16.mxu0 0
      %1750 = vmatpush1.bf16.msra.mxu0 0
      %1751 = vmatprep.subr.bf16.mxu0 0
      %1752 = vmatpush1.bf16.msra.mxu0 0
      %1753 = vmatprep.subr.bf16.mxu0 0
      %1754 = vmatpush1.bf16.msra.mxu0 0
      %1755 = vmatprep.subr.bf16.mxu0 0
      %1756 = vmatpush1.bf16.msra.mxu0 0
      %1757 = vmatprep.subr.bf16.mxu0 0
      %1758 = vmatpush1.bf16.msra.mxu0 0
      %1759 = vmatprep.subr.bf16.mxu0 0
      %1760 = vmatpush1.bf16.msra.mxu0 0
      %1761 = vmatprep.subr.bf16.mxu0 0
      %1762 = vmatpush1.bf16.msra.mxu0 0
      %1763 = vmatprep.subr.bf16.mxu0 0
      %1764 = vmatpush1.bf16.msra.mxu0 0
      %1765 = vmatprep.subr.bf16.mxu0 0
      %1766 = vmatpush1.bf16.msra.mxu0 0
      %1767 = vmatprep.subr.bf16.mxu0 0
      %1768 = vmatpush1.bf16.msra.mxu0 0
      %1769 = vmatprep.mubr.bf16.mxu0 0
      %1770 = vmatmul.mubr.bf16.gmra.mrb[0].mxu0 %v1714
      %v1771 = vpop.f32.mrb[0].mxu0
      %v1772 = vadd.f32 0.0, %v1771
      %v1773 = vpop.f32.mrb[0].mxu0
      %v1774 = vpop.f32.mrb[0].mxu0
      %v1775 = vadd.f32 0.0, %v1774
      %v1776 = vpop.f32.mrb[0].mxu0
      %1777 = vmatprep.mubr.bf16.mxu0 0
      %1778 = vmatmul.mubr.bf16.gmra.mrb[0].mxu0 %v1717
      %v1779 = vpop.f32.mrb[0].mxu0
      %v1780 = vadd.f32 0.0, %v1779
      %v1781 = vpop.f32.mrb[0].mxu0
      %v1782 = vpop.f32.mrb[0].mxu0
      %v1783 = vadd.f32 0.0, %v1782
      %v1784 = vpop.f32.mrb[0].mxu0
      %1785 = vmatprep.mubr.bf16.mxu0 0
      %1786 = vmatmul.mubr.bf16.gmra.mrb[0].mxu0 %v1720
      %v1787 = vpop.f32.mrb[0].mxu0
      %v1788 = vadd.f32 0.0, %v1787
      %v1789 = vpop.f32.mrb[0].mxu0
      %v1790 = vpop.f32.mrb[0].mxu0
      %v1791 = vadd.f32 0.0, %v1790
      %v1792 = vpop.f32.mrb[0].mxu0
      %1793 = vmatprep.mubr.bf16.mxu0 0
      %1794 = vmatmul.mubr.bf16.gmra.mrb[0].mxu0 %v1723
      %v1795 = vpop.f32.mrb[0].mxu0
      %v1796 = vadd.f32 0.0, %v1795
      %v1797 = vpop.f32.mrb[0].mxu0
      %v1798 = vpop.f32.mrb[0].mxu0
      %v1799 = vadd.f32 0.0, %v1798
      %v1800 = vpop.f32.mrb[0].mxu0
      %1801 = vmatprep.mubr.bf16.mxu0 0
      %1802 = vmatmul.mubr.bf16.gmra.mrb[0].mxu0 %v1726
      %v1803 = vpop.f32.mrb[0].mxu0
      %v1804 = vadd.f32 0.0, %v1803
      %v1805 = vpop.f32.mrb[0].mxu0
      %v1806 = vpop.f32.mrb[0].mxu0
      %v1807 = vadd.f32 0.0, %v1806
      %v1808 = vpop.f32.mrb[0].mxu0
      %1809 = vmatprep.mubr.bf16.mxu0 0
      %1810 = vmatmul.mubr.bf16.gmra.mrb[0].mxu0 %v1729
      %v1811 = vpop.f32.mrb[0].mxu0
      %v1812 = vadd.f32 0.0, %v1811
      %v1813 = vpop.f32.mrb[0].mxu0
      %v1814 = vpop.f32.mrb[0].mxu0
      %v1815 = vadd.f32 0.0, %v1814
      %v1816 = vpop.f32.mrb[0].mxu0
      %1817 = vmatprep.mubr.bf16.mxu0 0
      %1818 = vmatmul.mubr.bf16.gmra.mrb[0].mxu0 %v1732
      %v1819 = vpop.f32.mrb[0].mxu0
      %v1820 = vadd.f32 0.0, %v1819
      %v1821 = vpop.f32.mrb[0].mxu0
      %v1822 = vpop.f32.mrb[0].mxu0
      %v1823 = vadd.f32 0.0, %v1822
      %v1824 = vpop.f32.mrb[0].mxu0
      %1825 = vmatprep.mubr.bf16.mxu0 0
      %1826 = vmatmul.mubr.bf16.gmra.mrb[0].mxu0 %v1735
      %v1827 = vpop.f32.mrb[0].mxu0
      %v1828 = vadd.f32 0.0, %v1827
      %v1829 = vpop.f32.mrb[0].mxu0
      %v1830 = vpop.f32.mrb[0].mxu0
      %v1831 = vadd.f32 0.0, %v1830
      %v1832 = vpop.f32.mrb[0].mxu0
      %1833 = vdwg.mxu0
      %v1834 = vrcp.pop %v1655
      %v1835 = vrcp.pop %v1658
      %v1836 = vrcp.pop %v1661
      %v1837 = vrcp.pop %v1664
      %v1838 = vrcp.pop %v1667
      %v1839 = vrcp.pop %v1670
      %v1840 = vrcp.pop %v1673
      %v1841 = vrcp.pop %v1676
      %v1842 = vrcp.pop %v1679
      %v1843 = vrcp.pop %v1682
      %v1844 = vrcp.pop %v1685
      %v1845 = vrcp.pop %v1688
      %v1846 = vrcp.pop %v1691
      %v1847 = vrcp.pop %v1694
      %v1848 = vrcp.pop %v1697
      %v1849 = vrcp.pop %v1700
      %v1850 = vmul.f32 %v1772, %v1834
      %v1851 = vmul.f32 %v1775, %v1835
      %v1852 = vmul.f32 %v1780, %v1836
      %v1853 = vmul.f32 %v1783, %v1837
      %v1854 = vmul.f32 %v1788, %v1838
      %v1855 = vmul.f32 %v1791, %v1839
      %v1856 = vmul.f32 %v1796, %v1840
      %v1857 = vmul.f32 %v1799, %v1841
      %v1858 = vmul.f32 %v1804, %v1842
      %v1859 = vmul.f32 %v1807, %v1843
      %v1860 = vmul.f32 %v1812, %v1844
      %v1861 = vmul.f32 %v1815, %v1845
      %v1862 = vmul.f32 %v1820, %v1846
      %v1863 = vmul.f32 %v1823, %v1847
      %v1864 = vmul.f32 %v1828, %v1848
      %v1865 = vmul.f32 %v1831, %v1849
      %v1866 = vpack.c.bf16 %v1851, %v1850
      %v1867 = vpack.c.bf16 %v1853, %v1852
      %v1868 = vpack.c.bf16 %v1855, %v1854
      %v1869 = vpack.c.bf16 %v1857, %v1856
      %v1870 = vpack.c.bf16 %v1859, %v1858
      %v1871 = vpack.c.bf16 %v1861, %v1860
      %v1872 = vpack.c.bf16 %v1863, %v1862
      %v1873 = vpack.c.bf16 %v1865, %v1864
      %v1874 = vld [vmem:[%s8] sm:$0x1]
      %v1875 = vld [vmem:[%s9] sm:$0x1]
      %v1877 = vlaneseq
      %v1878 = vshrl.u32 %v1877, 7
      %v1879 = vsub.s32 0, %v1878
      %v1880 = vrot.slane %v1875, %v1879
      %v1883 = vsel %vm1338, %v1866, 0
      %v1886 = vsel %vm1338, %v1867, 0
      %v1889 = vsel %vm1338, %v1868, 0
      %v1892 = vsel %vm1338, %v1869, 0
      %v1895 = vsel %vm1338, %v1870, 0
      %v1898 = vsel %vm1338, %v1871, 0
      %v1901 = vsel %vm1338, %v1872, 0
      %v1904 = vsel %vm1338, %v1873, 0
      %vm1906 = vcmask 1040384
      %v1908 = vsel %vm1906, %v1874, 0
      %1910 = vmatprep.subr.bf16.mxu0 0
      %1911 = vmatpush1.bf16.msra.mxu0 %v1908
      %1912 = vmatprep.subr.bf16.mxu0 0
      %1913 = vmatpush1.bf16.msra.mxu0 0
      %1914 = vmatprep.subr.bf16.mxu0 0
      %1915 = vmatpush1.bf16.msra.mxu0 0
      %1916 = vmatprep.subr.bf16.mxu0 0
      %1917 = vmatpush1.bf16.msra.mxu0 0
      %1918 = vmatprep.subr.bf16.mxu0 0
      %1919 = vmatpush1.bf16.msra.mxu0 0
      %1920 = vmatprep.subr.bf16.mxu0 0
      %1921 = vmatpush1.bf16.msra.mxu0 0
      %1922 = vmatprep.subr.bf16.mxu0 0
      %1923 = vmatpush1.bf16.msra.mxu0 0
      %1924 = vmatprep.subr.bf16.mxu0 0
      %1925 = vmatpush1.bf16.msra.mxu0 0
      %1926 = vmatprep.subr.bf16.mxu0 0
      %1927 = vmatpush1.bf16.msra.mxu0 0
      %1928 = vmatprep.subr.bf16.mxu0 0
      %1929 = vmatpush1.bf16.msra.mxu0 0
      %1930 = vmatprep.subr.bf16.mxu0 0
      %1931 = vmatpush1.bf16.msra.mxu0 0
      %1932 = vmatprep.subr.bf16.mxu0 0
      %1933 = vmatpush1.bf16.msra.mxu0 0
      %1934 = vmatprep.subr.bf16.mxu0 0
      %1935 = vmatpush1.bf16.msra.mxu0 0
      %1936 = vmatprep.subr.bf16.mxu0 0
      %1937 = vmatpush1.bf16.msra.mxu0 0
      %1938 = vmatprep.subr.bf16.mxu0 0
      %1939 = vmatpush1.bf16.msra.mxu0 0
      %1940 = vmatprep.subr.bf16.mxu0 0
      %1941 = vmatpush1.bf16.msra.mxu0 0
      %1942 = vmatprep.mubr.bf16.mxu0 0
      %1943 = vmatmul.mubr.bf16.gmra.mrb[0].mxu0 %v1883
      %v1944 = vpop.f32.mrb[0].mxu0
      %v1945 = vadd.f32 %v1880, %v1944
      %v1946 = vpop.f32.mrb[0].mxu0
      %v1947 = vpop.f32.mrb[0].mxu0
      %v1948 = vadd.f32 %v1880, %v1947
      %v1949 = vpop.f32.mrb[0].mxu0
      %1950 = vmatprep.mubr.bf16.mxu0 0
      %1951 = vmatmul.mubr.bf16.gmra.mrb[0].mxu0 %v1886
      %v1952 = vpop.f32.mrb[0].mxu0
      %v1953 = vadd.f32 %v1880, %v1952
      %v1954 = vpop.f32.mrb[0].mxu0
      %v1955 = vpop.f32.mrb[0].mxu0
      %v1956 = vadd.f32 %v1880, %v1955
      %v1957 = vpop.f32.mrb[0].mxu0
      %1958 = vmatprep.mubr.bf16.mxu0 0
      %1959 = vmatmul.mubr.bf16.gmra.mrb[0].mxu0 %v1889
      %v1960 = vpop.f32.mrb[0].mxu0
      %v1961 = vadd.f32 %v1880, %v1960
      %v1962 = vpop.f32.mrb[0].mxu0
      %v1963 = vpop.f32.mrb[0].mxu0
      %v1964 = vadd.f32 %v1880, %v1963
      %v1965 = vpop.f32.mrb[0].mxu0
      %1966 = vmatprep.mubr.bf16.mxu0 0
      %1967 = vmatmul.mubr.bf16.gmra.mrb[0].mxu0 %v1892
      %v1968 = vpop.f32.mrb[0].mxu0
      %v1969 = vadd.f32 %v1880, %v1968
      %v1970 = vpop.f32.mrb[0].mxu0
      %v1971 = vpop.f32.mrb[0].mxu0
      %v1972 = vadd.f32 %v1880, %v1971
      %v1973 = vpop.f32.mrb[0].mxu0
      %1974 = vmatprep.mubr.bf16.mxu0 0
      %1975 = vmatmul.mubr.bf16.gmra.mrb[0].mxu0 %v1895
      %v1976 = vpop.f32.mrb[0].mxu0
      %v1977 = vadd.f32 %v1880, %v1976
      %v1978 = vpop.f32.mrb[0].mxu0
      %v1979 = vpop.f32.mrb[0].mxu0
      %v1980 = vadd.f32 %v1880, %v1979
      %v1981 = vpop.f32.mrb[0].mxu0
      %1982 = vmatprep.mubr.bf16.mxu0 0
      %1983 = vmatmul.mubr.bf16.gmra.mrb[0].mxu0 %v1898
      %v1984 = vpop.f32.mrb[0].mxu0
      %v1985 = vadd.f32 %v1880, %v1984
      %v1986 = vpop.f32.mrb[0].mxu0
      %v1987 = vpop.f32.mrb[0].mxu0
      %v1988 = vadd.f32 %v1880, %v1987
      %v1989 = vpop.f32.mrb[0].mxu0
      %1990 = vmatprep.mubr.bf16.mxu0 0
      %1991 = vmatmul.mubr.bf16.gmra.mrb[0].mxu0 %v1901
      %v1992 = vpop.f32.mrb[0].mxu0
      %v1993 = vadd.f32 %v1880, %v1992
      %v1994 = vpop.f32.mrb[0].mxu0
      %v1995 = vpop.f32.mrb[0].mxu0
      %v1996 = vadd.f32 %v1880, %v1995
      %v1997 = vpop.f32.mrb[0].mxu0
      %1998 = vmatprep.mubr.bf16.mxu0 0
      %1999 = vmatmul.mubr.bf16.gmra.mrb[0].mxu0 %v1904
      %v2000 = vpop.f32.mrb[0].mxu0
      %v2001 = vadd.f32 %v1880, %v2000
      %v2002 = vpop.f32.mrb[0].mxu0
      %v2003 = vpop.f32.mrb[0].mxu0
      %v2004 = vadd.f32 %v1880, %v2003
      %v2005 = vpop.f32.mrb[0].mxu0
      %2006 = vdwg.mxu0
      %v2007 = vadd.f32 %v1945, %v1108
      %v2008 = vadd.f32 %v1948, %v1109
      %v2009 = vadd.f32 %v1953, %v1110
      %v2010 = vadd.f32 %v1956, %v1111
      %v2011 = vadd.f32 %v1961, %v1112
      %v2012 = vadd.f32 %v1964, %v1113
      %v2013 = vadd.f32 %v1969, %v1114
      %v2014 = vadd.f32 %v1972, %v1115
      %v2015 = vadd.f32 %v1977, %v1116
      %v2016 = vadd.f32 %v1980, %v1117
      %v2017 = vadd.f32 %v1985, %v1118
      %v2018 = vadd.f32 %v1988, %v1119
      %v2019 = vadd.f32 %v1993, %v1120
      %v2020 = vadd.f32 %v1996, %v1121
      %v2021 = vadd.f32 %v2001, %v1122
      %v2022 = vadd.f32 %v2004, %v1123
      %2023 = vst.msk [vmem:[%s417] sm:$0xff] %vm1132, %v2007
      %2024 = vst.msk [vmem:[%s417 + $0x8] sm:$0xff] %vm1132, %v2008
      %2025 = vst.msk [vmem:[%s417 + $0x10] sm:$0xff] %vm1132, %v2009
      %2026 = vst.msk [vmem:[%s417 + $0x18] sm:$0xff] %vm1132, %v2010
      %2027 = vst.msk [vmem:[%s417 + $0x20] sm:$0xff] %vm1132, %v2011
      %2028 = vst.msk [vmem:[%s417 + $0x28] sm:$0xff] %vm1132, %v2012
      %2029 = vst.msk [vmem:[%s417 + $0x30] sm:$0xff] %vm1132, %v2013
      %2030 = vst.msk [vmem:[%s417 + $0x38] sm:$0xff] %vm1132, %v2014
      %2031 = vst.msk [vmem:[%s417 + $0x40] sm:$0xff] %vm1132, %v2015
      %2032 = vst.msk [vmem:[%s417 + $0x48] sm:$0xff] %vm1132, %v2016
      %2033 = vst.msk [vmem:[%s417 + $0x50] sm:$0xff] %vm1132, %v2017
      %2034 = vst.msk [vmem:[%s417 + $0x58] sm:$0xff] %vm1132, %v2018
      %2035 = vst.msk [vmem:[%s417 + $0x60] sm:$0xff] %vm1132, %v2019
      %2036 = vst.msk [vmem:[%s417 + $0x68] sm:$0xff] %vm1132, %v2020
      %2037 = vst.msk [vmem:[%s417 + $0x70] sm:$0xff] %vm1132, %v2021
      %2038 = vst.msk [vmem:[%s417 + $0x78] sm:$0xff] %vm1132, %v2022
      %s2039 = smul.u32 16, %s26
      %p2040 = scmp.lt.s32.totalorder %s25, 1
      %s2041 = scalar_select %p2040, %s25, 1
      %p2042 = scmp.lt.s32.totalorder %s2039, 31
      %s2043 = scalar_select %p2042, %s2039, 31
      %s2044 = smul.addr %s2041, 32
      %s2045 = sadd.s32 %s2043, %s2044
      %s2046 = smul.addr %s2045, 8
      %s2047 = scalar_lea.vmem %s10, %s2046
      // Predicated region
      $region65: #{tpu_custom_call.1} parent=59 // pred_check
        %p2048 = pneg %p275
      $region66: #{tpu_custom_call.1} parent=59 // pred_check_branch
        %2050 = sbr.rel (%p2048) target = $region68
      $region67: #{tpu_custom_call.1} parent=59 // pred_region
        %s2051 = smul.u32 16, %s26
      $region68: #{tpu_custom_call.1} parent=59 // pred_fallthru
        _
    $region60: #{tpu_custom_call.1} parent=5 // pred_fallthru
      _
    %p2052 = scmp.le.s32.totalorder 2, %s16
    // Predicated region
    $region69: #{tpu_custom_call.1} parent=5 // pred_check
      %p2053 = pneg %p2052
    $region70: #{tpu_custom_call.1} parent=5 // pred_check_branch
      %2055 = sbr.rel (%p2053) target = $region72
    $region71: #{tpu_custom_call.1} parent=5 // pred_region
      %s2056 = ssub.s32 %s16, 2
      // Predicated region
      $region73: #{tpu_custom_call.1} parent=71 // pred_check
        %p2057 = pneg %p281
      $region74: #{tpu_custom_call.1} parent=71 // pred_check_branch
        %2059 = sbr.rel (%p2057) target = $region76
      $region75: #{tpu_custom_call.1} parent=71 // pred_region
        %s2060 = smul.u32 16, %s28
        %p2061 = scmp.lt.s32.totalorder %s27, 1
        %s2062 = scalar_select %p2061, %s27, 1
        %p2063 = scmp.lt.s32.totalorder %s2060, 31
        %s2064 = scalar_select %p2063, %s2060, 31
        %s2065 = smul.addr %s2062, 32
        %s2066 = sadd.s32 %s2064, %s2065
        %s2067 = smul.addr %s2066, 8
        %s2068 = scalar_lea.vmem %s10, %s2067
      $region76: #{tpu_custom_call.1} parent=71 // pred_fallthru
        _
    $region72: #{tpu_custom_call.1} parent=5 // pred_fallthru
      _
  $region6: #{tpu_custom_call.1} parent=0 // loop_footer
    %s20 = sadd.s32 1, %s16
  $region7: #{tpu_custom_call.1} parent=0 // loop_footer_branch
    %15 = sbr.rel target = $region3
  $region8: #{tpu_custom_call.1} parent=0 // loop_exit
    _

</llo_original>
